<compile_context>
chip_gen: v7x
topology: tpu7x:2x2x1
jax: 0.10.0
libtpu: 0.0.40
codegen_flags: <defaults>
</compile_context>

<pallas_src>
import functools

import numpy as np
import jax
import jax.numpy as jnp
from jax.experimental import pallas as pl
from jax.experimental.pallas import tpu as pltpu


def _diffusion_kernel(L, Bt,
                      x_ref, c1_ref, c2_ref, c3_ref, f1_ref, f2_ref, f3_ref,
                      out_ref):
    f32 = jnp.float32
    N = L * Bt                                    # lanes per batch tile
    C1, C2, C3 = 16, 32, 64

    def lrelu(v):                                 # LeakyReLU(0.1)
        return jnp.where(v > 0, v, 0.1 * v)

    def silu(v):                                  # v * sigmoid(v), via tanh (EUP)
        return v * (0.5 * (jnp.tanh(0.5 * v) + 1.0))

    # "same" zero-padding taps: shift by exactly Bt lanes (vreg-aligned) with a
    # zero block at the sequence boundary.  Pure aligned vld/vst, no XLU, no masks.
    def shift_prev(h):                            # value at position l-1
        z = jnp.zeros((h.shape[0], Bt), f32)
        return jnp.concatenate([z, h[:, :N - Bt]], axis=1)

    def shift_next(h):                            # value at position l+1
        z = jnp.zeros((h.shape[0], Bt), f32)
        return jnp.concatenate([h[:, Bt:], z], axis=1)

    # ---- conv1 (Cin = 1): rank-1 taps, pure VPU ----
    x = x_ref[...]                                # (1, N)
    w1 = c1_ref[:, 0:3]                           # (16, 3)
    b1 = c1_ref[:, 3:4]                           # (16, 1)
    h = lrelu(w1[:, 0:1] * shift_prev(x) + w1[:, 1:2] * x
              + w1[:, 2:3] * shift_next(x) + b1)  # (16, N)

    # ---- conv2 / conv3: three taps fused into one K-stacked MXU matmul ----
    def conv(h, w_ref, cin):
        s = jnp.concatenate([shift_prev(h), h, shift_next(h)], axis=0)  # (3*cin, N)
        w = w_ref[:, :3 * cin]
        b = w_ref[:, 3 * cin:3 * cin + 1]
        return lrelu(jnp.dot(w, s, preferred_element_type=f32) + b)

    h = conv(h, c2_ref, C1)                       # (32, N)
    h = conv(h, c3_ref, C2)                       # (64, N)

    # ---- fc1: one K = 64*L matmul over the l-stacked activation ----
    hstack = jnp.concatenate([h[:, l * Bt:(l + 1) * Bt] for l in range(L)],
                             axis=0)              # (64*L, Bt), row = l*64 + c
    wf1 = f1_ref[:, :C3 * L]
    fb1 = f1_ref[:, C3 * L:C3 * L + 1]
    z = silu(jnp.dot(wf1, hstack, preferred_element_type=f32) + fb1)    # (64, Bt)

    # ---- fc2 / fc3 ----
    z = silu(jnp.dot(f2_ref[:, :C3], z, preferred_element_type=f32)
             + f2_ref[:, C3:C3 + 1])              # (32, Bt)
    out_ref[...] = (jnp.dot(f3_ref[:, :C2], z, preferred_element_type=f32)
                    + f3_ref[:, C2:C2 + 1])       # (theta_dim, Bt)


def init_params(key, theta_dim, y_dim):
    """Deterministic synthetic parameters with PyTorch-default-like scaling."""
    L = theta_dim + y_dim + 1
    keys = jax.random.split(key, 12)

    def uni(k, shape, fan_in):
        bound = 1.0 / np.sqrt(fan_in)
        return jax.random.uniform(k, shape, jnp.float32, -bound, bound)

    return {
        "cw1": uni(keys[0], (16, 1, 3), 1 * 3),
        "cb1": uni(keys[1], (16,), 1 * 3),
        "cw2": uni(keys[2], (32, 16, 3), 16 * 3),
        "cb2": uni(keys[3], (32,), 16 * 3),
        "cw3": uni(keys[4], (64, 32, 3), 32 * 3),
        "cb3": uni(keys[5], (64,), 32 * 3),
        "fw1": uni(keys[6], (64, 64 * L), 64 * L),
        "fb1": uni(keys[7], (64,), 64 * L),
        "fw2": uni(keys[8], (32, 64), 64),
        "fb2": uni(keys[9], (32,), 64),
        "fw3": uni(keys[10], (theta_dim, 32), 32),
        "fb3": uni(keys[11], (theta_dim,), 32),
    }


def _round_up(v, m):
    return -(-v // m) * m


@functools.partial(jax.jit, static_argnames=("num_timesteps", "batch_tile"))
def cnn_diffusion_forward(theta, y, t, params, *, num_timesteps, batch_tile=None):
    B, theta_dim = theta.shape
    y_dim = y.shape[1]
    L = theta_dim + y_dim + 1

    if batch_tile is None:
        # ~half the padded batch per tile (2 grid steps => both v7x TCs used;
        # an extra sequential step costs <1us on single-TC v5e/v6e), capped so
        # huge batches keep per-step VMEM modest.
        Bp128 = _round_up(B, 128)
        batch_tile = min(1024, max(128, _round_up(-(-Bp128 // 2), 128)))
    Bt = batch_tile
    assert Bt % 128 == 0, "batch tile must be lane-aligned (multiple of 128)"
    G = pl.cdiv(B, Bt)                  # number of batch tiles
    Bp = G * Bt                         # padded batch
    N = L * Bt                          # lanes per tile (multiple of 128)

    # glue (fused under jit): concatenated (B, L) input, padded batch, l-major
    # lanes per tile: flat column index = i*N + l*Bt + b.
    t_exp = (t.astype(jnp.float32) / num_timesteps)[:, None]
    x = jnp.concatenate([theta, y, t_exp], axis=-1).astype(jnp.float32)   # (B, L)
    x = jnp.pad(x, ((0, Bp - B), (0, 0)))                                 # (Bp, L)
    xt = x.reshape(G, Bt, L).transpose(0, 2, 1).reshape(1, G * N)

    # parameter re-layouts (tiny, batch-independent); bias packed as last column.
    c1 = jnp.concatenate([params["cw1"][:, 0, :], params["cb1"][:, None]], axis=1)   # (16, 4)
    w2 = jnp.transpose(params["cw2"], (0, 2, 1)).reshape(32, 3 * 16)      # [o, k*16+c]
    c2 = jnp.concatenate([w2, params["cb2"][:, None]], axis=1)            # (32, 49)
    w3 = jnp.transpose(params["cw3"], (0, 2, 1)).reshape(64, 3 * 32)      # [o, k*32+c]
    c3 = jnp.concatenate([w3, params["cb3"][:, None]], axis=1)            # (64, 97)
    # fw1[o, c*L + l] -> W1_stack[o, l*64 + c] (PyTorch flattens (C, L) C-major)
    wf1 = jnp.transpose(params["fw1"].reshape(64, 64, L), (0, 2, 1)).reshape(64, 64 * L)
    f1 = jnp.concatenate([wf1, params["fb1"][:, None]], axis=1)           # (64, 64L+1)
    f2 = jnp.concatenate([params["fw2"], params["fb2"][:, None]], axis=1)  # (32, 65)
    f3 = jnp.concatenate([params["fw3"], params["fb3"][:, None]], axis=1)  # (theta_dim, 33)

    weights = (c1, c2, c3, f1, f2, f3)

    def const_spec(a):
        return pl.BlockSpec(a.shape, lambda i: (0,) * a.ndim)

    kernel = functools.partial(_diffusion_kernel, L, Bt)
    out = pl.pallas_call(
        kernel,
        out_shape=jax.ShapeDtypeStruct((theta_dim, Bp), jnp.float32),
        grid=(G,),
        in_specs=[pl.BlockSpec((1, N), lambda i: (0, i))]
                 + [const_spec(w) for w in weights],
        out_specs=pl.BlockSpec((theta_dim, Bt), lambda i: (0, i)),
        compiler_params=pltpu.CompilerParams(
            dimension_semantics=("parallel",),
            vmem_limit_bytes=32 * 1024 * 1024),
    )(xt, *weights)

    return out.T[:B]                                                      # (B, theta_dim)


def reference_forward(theta, y, t, params, num_timesteps):
    """Pure-JAX reference matching the PyTorch module semantics."""
    B = theta.shape[0]
    L = theta.shape[1] + y.shape[1] + 1
    t_exp = (t.astype(jnp.float32) / num_timesteps)[:, None]
    x = jnp.concatenate([theta, y, t_exp], axis=-1)[:, None, :]           # (B, 1, L)

    def conv1d(x, w, b):
        xp = jnp.pad(x, ((0, 0), (0, 0), (1, 1)))
        out = b[None, :, None]
        for k in range(3):
            out = out + jnp.einsum("bcl,oc->bol", xp[:, :, k:k + L], w[:, :, k])
        return out

    def lrelu(v):
        return jnp.where(v > 0, v, 0.1 * v)

    def silu(v):
        return v * jax.nn.sigmoid(v)

    h = lrelu(conv1d(x, params["cw1"], params["cb1"]))
    h = lrelu(conv1d(h, params["cw2"], params["cb2"]))
    h = lrelu(conv1d(h, params["cw3"], params["cb3"]))
    flat = h.reshape(B, -1)                                               # (B, 64*L), C-major
    z = silu(flat @ params["fw1"].T + params["fb1"])
    z = silu(z @ params["fw2"].T + params["fb2"])
    return z @ params["fw3"].T + params["fb3"]


if __name__ == "__main__":
    theta_dim, y_dim, num_timesteps = 3, 4, 100
    B = 200   # padded to 256 samples -> 2 "parallel" tiles of 128 (both v7x TCs)

    key = jax.random.PRNGKey(0)
    kp, kth, ky, kt = jax.random.split(key, 4)
    params = init_params(kp, theta_dim, y_dim)
    theta = jax.random.normal(kth, (B, theta_dim), jnp.float32)
    y = jax.random.normal(ky, (B, y_dim), jnp.float32)
    t = jax.random.randint(kt, (B,), 0, num_timesteps, jnp.int32)

    out = cnn_diffusion_forward(theta, y, t, params, num_timesteps=num_timesteps)
    out = jax.block_until_ready(out)
    assert out.shape == (B, theta_dim)

    ref = reference_forward(theta, y, t, params, num_timesteps)
    np.testing.assert_allclose(np.asarray(out), np.asarray(ref), rtol=1e-4, atol=1e-4)

    # TODO(synk): the module's `sample()` reverse-diffusion loop is host-side
    # orchestration (torch.randn + schedule buffers) and not part of forward;
    # it is intentionally not implemented as a kernel.
    print("KERNEL_OK")
</pallas_src>

<mosaic_0001>
module attributes {stable_mosaic.version = 11 : i64} {
  func.func @_diffusion_kernel(%arg0: i32, %arg1: memref<1x1024xf32, #tpu.memory_space<vmem>>, %arg2: memref<16x4xf32, #tpu.memory_space<vmem>>, %arg3: memref<32x49xf32, #tpu.memory_space<vmem>>, %arg4: memref<64x97xf32, #tpu.memory_space<vmem>>, %arg5: memref<64x513xf32, #tpu.memory_space<vmem>>, %arg6: memref<32x65xf32, #tpu.memory_space<vmem>>, %arg7: memref<3x33xf32, #tpu.memory_space<vmem>>, %arg8: memref<3x128xf32, #tpu.memory_space<vmem>>) attributes {dimension_semantics = [#tpu.dimension_semantics<parallel>], iteration_bounds = array<i64: 2>, scalar_prefetch = 0 : i64, scratch_operands = 0 : i64, tpu.core_type = #tpu.core_type<tc>, window_params = [{transform_indices = @transform_0, window_bounds = array<i64: 1, 1024>}, {pipeline_mode = #tpu.pipeline_mode<synchronous>, transform_indices = @transform_1, window_bounds = array<i64: 16, 4>}, {pipeline_mode = #tpu.pipeline_mode<synchronous>, transform_indices = @transform_2, window_bounds = array<i64: 32, 49>}, {pipeline_mode = #tpu.pipeline_mode<synchronous>, transform_indices = @transform_3, window_bounds = array<i64: 64, 97>}, {pipeline_mode = #tpu.pipeline_mode<synchronous>, transform_indices = @transform_4, window_bounds = array<i64: 64, 513>}, {pipeline_mode = #tpu.pipeline_mode<synchronous>, transform_indices = @transform_5, window_bounds = array<i64: 32, 65>}, {pipeline_mode = #tpu.pipeline_mode<synchronous>, transform_indices = @transform_6, window_bounds = array<i64: 3, 33>}, {transform_indices = @transform_7, window_bounds = array<i64: 3, 128>}]} {
    %c0 = arith.constant 0 : index
    %c0_0 = arith.constant 0 : index
    %0 = vector.load %arg1[%c0, %c0_0] : memref<1x1024xf32, #tpu.memory_space<vmem>>, vector<1x1024xf32>
    %c0_1 = arith.constant 0 : index
    %c0_2 = arith.constant 0 : index
    %1 = vector.load %arg2[%c0_1, %c0_2] : memref<16x4xf32, #tpu.memory_space<vmem>>, vector<16x3xf32>
    %c0_3 = arith.constant 0 : index
    %c3 = arith.constant 3 : index
    %2 = vector.load %arg2[%c0_3, %c3] : memref<16x4xf32, #tpu.memory_space<vmem>>, vector<16x1xf32>
    %3 = vector.extract_strided_slice %1 {offsets = [0, 0], sizes = [16, 1], strides = [1, 1]} : vector<16x3xf32> to vector<16x1xf32>
    %cst = arith.constant 0.000000e+00 : f32
    %4 = vector.broadcast %cst : f32 to vector<1x128xf32>
    %5 = vector.extract_strided_slice %0 {offsets = [0, 0], sizes = [1, 896], strides = [1, 1]} : vector<1x1024xf32> to vector<1x896xf32>
    %6 = tpu.concatenate %4, %5 in 1 : vector<1x128xf32>, vector<1x896xf32> -> vector<1x1024xf32>
    %7 = vector.broadcast %3 : vector<16x1xf32> to vector<16x1024xf32>
    %8 = vector.broadcast %6 : vector<1x1024xf32> to vector<16x1024xf32>
    %9 = arith.mulf %7, %8 : vector<16x1024xf32>
    %10 = vector.extract_strided_slice %1 {offsets = [0, 1], sizes = [16, 1], strides = [1, 1]} : vector<16x3xf32> to vector<16x1xf32>
    %11 = vector.broadcast %10 : vector<16x1xf32> to vector<16x1024xf32>
    %12 = vector.broadcast %0 : vector<1x1024xf32> to vector<16x1024xf32>
    %13 = arith.mulf %11, %12 : vector<16x1024xf32>
    %14 = arith.addf %9, %13 : vector<16x1024xf32>
    %15 = vector.extract_strided_slice %1 {offsets = [0, 2], sizes = [16, 1], strides = [1, 1]} : vector<16x3xf32> to vector<16x1xf32>
    %cst_4 = arith.constant 0.000000e+00 : f32
    %16 = vector.broadcast %cst_4 : f32 to vector<1x128xf32>
    %17 = vector.extract_strided_slice %0 {offsets = [0, 128], sizes = [1, 896], strides = [1, 1]} : vector<1x1024xf32> to vector<1x896xf32>
    %18 = tpu.concatenate %17, %16 in 1 : vector<1x896xf32>, vector<1x128xf32> -> vector<1x1024xf32>
    %19 = vector.broadcast %15 : vector<16x1xf32> to vector<16x1024xf32>
    %20 = vector.broadcast %18 : vector<1x1024xf32> to vector<16x1024xf32>
    %21 = arith.mulf %19, %20 : vector<16x1024xf32>
    %22 = arith.addf %14, %21 : vector<16x1024xf32>
    %23 = vector.broadcast %2 : vector<16x1xf32> to vector<16x1024xf32>
    %24 = arith.addf %22, %23 : vector<16x1024xf32>
    %cst_5 = arith.constant 0.000000e+00 : f32
    %25 = vector.broadcast %cst_5 : f32 to vector<16x1024xf32>
    %26 = arith.cmpf ogt, %24, %25 : vector<16x1024xf32>
    %cst_6 = arith.constant 1.000000e-01 : f32
    %27 = vector.broadcast %cst_6 : f32 to vector<16x1024xf32>
    %28 = arith.mulf %27, %24 : vector<16x1024xf32>
    %29 = arith.select %26, %24, %28 : vector<16x1024xi1>, vector<16x1024xf32>
    %cst_7 = arith.constant 0.000000e+00 : f32
    %30 = vector.broadcast %cst_7 : f32 to vector<16x128xf32>
    %31 = vector.extract_strided_slice %29 {offsets = [0, 0], sizes = [16, 896], strides = [1, 1]} : vector<16x1024xf32> to vector<16x896xf32>
    %32 = tpu.concatenate %30, %31 in 1 : vector<16x128xf32>, vector<16x896xf32> -> vector<16x1024xf32>
    %cst_8 = arith.constant 0.000000e+00 : f32
    %33 = vector.broadcast %cst_8 : f32 to vector<16x128xf32>
    %34 = vector.extract_strided_slice %29 {offsets = [0, 128], sizes = [16, 896], strides = [1, 1]} : vector<16x1024xf32> to vector<16x896xf32>
    %35 = tpu.concatenate %34, %33 in 1 : vector<16x896xf32>, vector<16x128xf32> -> vector<16x1024xf32>
    %36 = tpu.concatenate %32, %29, %35 in 0 : vector<16x1024xf32>, vector<16x1024xf32>, vector<16x1024xf32> -> vector<48x1024xf32>
    %c0_9 = arith.constant 0 : index
    %c0_10 = arith.constant 0 : index
    %37 = vector.load %arg3[%c0_9, %c0_10] : memref<32x49xf32, #tpu.memory_space<vmem>>, vector<32x48xf32>
    %c0_11 = arith.constant 0 : index
    %c48 = arith.constant 48 : index
    %38 = vector.load %arg3[%c0_11, %c48] : memref<32x49xf32, #tpu.memory_space<vmem>>, vector<32x1xf32>
    %cst_12 = arith.constant dense<0.000000e+00> : vector<32x1024xf32>
    %39 = tpu.matmul %37, %36, %cst_12 {dimension_numbers = #tpu.dot_dimension_numbers<[1], [0], [0], [1], [0, 0, 1, 1], [], []>} : vector<32x48xf32>, vector<48x1024xf32>, vector<32x1024xf32> -> vector<32x1024xf32>
    %40 = vector.broadcast %38 : vector<32x1xf32> to vector<32x1024xf32>
    %41 = arith.addf %39, %40 : vector<32x1024xf32>
    %cst_13 = arith.constant 0.000000e+00 : f32
    %42 = vector.broadcast %cst_13 : f32 to vector<32x1024xf32>
    %43 = arith.cmpf ogt, %41, %42 : vector<32x1024xf32>
    %cst_14 = arith.constant 1.000000e-01 : f32
    %44 = vector.broadcast %cst_14 : f32 to vector<32x1024xf32>
    %45 = arith.mulf %44, %41 : vector<32x1024xf32>
    %46 = arith.select %43, %41, %45 : vector<32x1024xi1>, vector<32x1024xf32>
    %cst_15 = arith.constant 0.000000e+00 : f32
    %47 = vector.broadcast %cst_15 : f32 to vector<32x128xf32>
    %48 = vector.extract_strided_slice %46 {offsets = [0, 0], sizes = [32, 896], strides = [1, 1]} : vector<32x1024xf32> to vector<32x896xf32>
    %49 = tpu.concatenate %47, %48 in 1 : vector<32x128xf32>, vector<32x896xf32> -> vector<32x1024xf32>
    %cst_16 = arith.constant 0.000000e+00 : f32
    %50 = vector.broadcast %cst_16 : f32 to vector<32x128xf32>
    %51 = vector.extract_strided_slice %46 {offsets = [0, 128], sizes = [32, 896], strides = [1, 1]} : vector<32x1024xf32> to vector<32x896xf32>
    %52 = tpu.concatenate %51, %50 in 1 : vector<32x896xf32>, vector<32x128xf32> -> vector<32x1024xf32>
    %53 = tpu.concatenate %49, %46, %52 in 0 : vector<32x1024xf32>, vector<32x1024xf32>, vector<32x1024xf32> -> vector<96x1024xf32>
    %c0_17 = arith.constant 0 : index
    %c0_18 = arith.constant 0 : index
    %54 = vector.load %arg4[%c0_17, %c0_18] : memref<64x97xf32, #tpu.memory_space<vmem>>, vector<64x96xf32>
    %c0_19 = arith.constant 0 : index
    %c96 = arith.constant 96 : index
    %55 = vector.load %arg4[%c0_19, %c96] : memref<64x97xf32, #tpu.memory_space<vmem>>, vector<64x1xf32>
    %cst_20 = arith.constant dense<0.000000e+00> : vector<64x1024xf32>
    %56 = tpu.matmul %54, %53, %cst_20 {dimension_numbers = #tpu.dot_dimension_numbers<[1], [0], [0], [1], [0, 0, 1, 1], [], []>} : vector<64x96xf32>, vector<96x1024xf32>, vector<64x1024xf32> -> vector<64x1024xf32>
    %57 = vector.broadcast %55 : vector<64x1xf32> to vector<64x1024xf32>
    %58 = arith.addf %56, %57 : vector<64x1024xf32>
    %cst_21 = arith.constant 0.000000e+00 : f32
    %59 = vector.broadcast %cst_21 : f32 to vector<64x1024xf32>
    %60 = arith.cmpf ogt, %58, %59 : vector<64x1024xf32>
    %cst_22 = arith.constant 1.000000e-01 : f32
    %61 = vector.broadcast %cst_22 : f32 to vector<64x1024xf32>
    %62 = arith.mulf %61, %58 : vector<64x1024xf32>
    %63 = arith.select %60, %58, %62 : vector<64x1024xi1>, vector<64x1024xf32>
    %64 = vector.extract_strided_slice %63 {offsets = [0, 0], sizes = [64, 128], strides = [1, 1]} : vector<64x1024xf32> to vector<64x128xf32>
    %65 = vector.extract_strided_slice %63 {offsets = [0, 128], sizes = [64, 128], strides = [1, 1]} : vector<64x1024xf32> to vector<64x128xf32>
    %66 = vector.extract_strided_slice %63 {offsets = [0, 256], sizes = [64, 128], strides = [1, 1]} : vector<64x1024xf32> to vector<64x128xf32>
    %67 = vector.extract_strided_slice %63 {offsets = [0, 384], sizes = [64, 128], strides = [1, 1]} : vector<64x1024xf32> to vector<64x128xf32>
    %68 = vector.extract_strided_slice %63 {offsets = [0, 512], sizes = [64, 128], strides = [1, 1]} : vector<64x1024xf32> to vector<64x128xf32>
    %69 = vector.extract_strided_slice %63 {offsets = [0, 640], sizes = [64, 128], strides = [1, 1]} : vector<64x1024xf32> to vector<64x128xf32>
    %70 = vector.extract_strided_slice %63 {offsets = [0, 768], sizes = [64, 128], strides = [1, 1]} : vector<64x1024xf32> to vector<64x128xf32>
    %71 = vector.extract_strided_slice %63 {offsets = [0, 896], sizes = [64, 128], strides = [1, 1]} : vector<64x1024xf32> to vector<64x128xf32>
    %72 = tpu.concatenate %64, %65, %66, %67, %68, %69, %70, %71 in 0 : vector<64x128xf32>, vector<64x128xf32>, vector<64x128xf32>, vector<64x128xf32>, vector<64x128xf32>, vector<64x128xf32>, vector<64x128xf32>, vector<64x128xf32> -> vector<512x128xf32>
    %c0_23 = arith.constant 0 : index
    %c0_24 = arith.constant 0 : index
    %73 = vector.load %arg5[%c0_23, %c0_24] : memref<64x513xf32, #tpu.memory_space<vmem>>, vector<64x512xf32>
    %c0_25 = arith.constant 0 : index
    %c512 = arith.constant 512 : index
    %74 = vector.load %arg5[%c0_25, %c512] : memref<64x513xf32, #tpu.memory_space<vmem>>, vector<64x1xf32>
    %cst_26 = arith.constant dense<0.000000e+00> : vector<64x128xf32>
    %75 = tpu.matmul %73, %72, %cst_26 {dimension_numbers = #tpu.dot_dimension_numbers<[1], [0], [0], [1], [0, 0, 1, 1], [], []>} : vector<64x512xf32>, vector<512x128xf32>, vector<64x128xf32> -> vector<64x128xf32>
    %76 = vector.broadcast %74 : vector<64x1xf32> to vector<64x128xf32>
    %77 = arith.addf %75, %76 : vector<64x128xf32>
    %cst_27 = arith.constant 5.000000e-01 : f32
    %78 = vector.broadcast %cst_27 : f32 to vector<64x128xf32>
    %79 = arith.mulf %78, %77 : vector<64x128xf32>
    %80 = math.tanh %79 : vector<64x128xf32>
    %cst_28 = arith.constant 1.000000e+00 : f32
    %81 = vector.broadcast %cst_28 : f32 to vector<64x128xf32>
    %82 = arith.addf %80, %81 : vector<64x128xf32>
    %cst_29 = arith.constant 5.000000e-01 : f32
    %83 = vector.broadcast %cst_29 : f32 to vector<64x128xf32>
    %84 = arith.mulf %83, %82 : vector<64x128xf32>
    %85 = arith.mulf %77, %84 : vector<64x128xf32>
    %c0_30 = arith.constant 0 : index
    %c0_31 = arith.constant 0 : index
    %86 = vector.load %arg6[%c0_30, %c0_31] : memref<32x65xf32, #tpu.memory_space<vmem>>, vector<32x64xf32>
    %cst_32 = arith.constant dense<0.000000e+00> : vector<32x128xf32>
    %87 = tpu.matmul %86, %85, %cst_32 {dimension_numbers = #tpu.dot_dimension_numbers<[1], [0], [0], [1], [0, 0, 1, 1], [], []>} : vector<32x64xf32>, vector<64x128xf32>, vector<32x128xf32> -> vector<32x128xf32>
    %c0_33 = arith.constant 0 : index
    %c64 = arith.constant 64 : index
    %88 = vector.load %arg6[%c0_33, %c64] : memref<32x65xf32, #tpu.memory_space<vmem>>, vector<32x1xf32>
    %89 = vector.broadcast %88 : vector<32x1xf32> to vector<32x128xf32>
    %90 = arith.addf %87, %89 : vector<32x128xf32>
    %cst_34 = arith.constant 5.000000e-01 : f32
    %91 = vector.broadcast %cst_34 : f32 to vector<32x128xf32>
    %92 = arith.mulf %91, %90 : vector<32x128xf32>
    %93 = math.tanh %92 : vector<32x128xf32>
    %cst_35 = arith.constant 1.000000e+00 : f32
    %94 = vector.broadcast %cst_35 : f32 to vector<32x128xf32>
    %95 = arith.addf %93, %94 : vector<32x128xf32>
    %cst_36 = arith.constant 5.000000e-01 : f32
    %96 = vector.broadcast %cst_36 : f32 to vector<32x128xf32>
    %97 = arith.mulf %96, %95 : vector<32x128xf32>
    %98 = arith.mulf %90, %97 : vector<32x128xf32>
    %c0_37 = arith.constant 0 : index
    %c0_38 = arith.constant 0 : index
    %99 = vector.load %arg7[%c0_37, %c0_38] : memref<3x33xf32, #tpu.memory_space<vmem>>, vector<3x32xf32>
    %cst_39 = arith.constant dense<0.000000e+00> : vector<3x128xf32>
    %100 = tpu.matmul %99, %98, %cst_39 {dimension_numbers = #tpu.dot_dimension_numbers<[1], [0], [0], [1], [0, 0, 1, 1], [], []>} : vector<3x32xf32>, vector<32x128xf32>, vector<3x128xf32> -> vector<3x128xf32>
    %c0_40 = arith.constant 0 : index
    %c32 = arith.constant 32 : index
    %101 = vector.load %arg7[%c0_40, %c32] : memref<3x33xf32, #tpu.memory_space<vmem>>, vector<3x1xf32>
    %102 = vector.broadcast %101 : vector<3x1xf32> to vector<3x128xf32>
    %103 = arith.addf %100, %102 : vector<3x128xf32>
    %c0_41 = arith.constant 0 : index
    %c0_42 = arith.constant 0 : index
    %104 = vector.load %arg8[%c0_41, %c0_42] : memref<3x128xf32, #tpu.memory_space<vmem>>, vector<3x128xf32>
    tpu.vector_store %arg8[%c0_41, %c0_42], %103 {strides = array<i32>} : memref<3x128xf32, #tpu.memory_space<vmem>>, vector<3x128xf32>,
    return
  }
  func.func @transform_0(%arg0: i32) -> (i32, i32) {
    %c0_i32 = arith.constant 0 : i32
    %c0_i32_0 = arith.constant 0 : i32
    return %c0_i32, %arg0 : i32, i32
  }
  func.func @transform_1(%arg0: i32) -> (i32, i32) {
    %c0_i32 = arith.constant 0 : i32
    %c0_i32_0 = arith.constant 0 : i32
    %c0_i32_1 = arith.constant 0 : i32
    return %c0_i32, %c0_i32_0 : i32, i32
  }
  func.func @transform_2(%arg0: i32) -> (i32, i32) {
    %c0_i32 = arith.constant 0 : i32
    %c0_i32_0 = arith.constant 0 : i32
    %c0_i32_1 = arith.constant 0 : i32
    return %c0_i32, %c0_i32_0 : i32, i32
  }
  func.func @transform_3(%arg0: i32) -> (i32, i32) {
    %c0_i32 = arith.constant 0 : i32
    %c0_i32_0 = arith.constant 0 : i32
    %c0_i32_1 = arith.constant 0 : i32
    return %c0_i32, %c0_i32_0 : i32, i32
  }
  func.func @transform_4(%arg0: i32) -> (i32, i32) {
    %c0_i32 = arith.constant 0 : i32
    %c0_i32_0 = arith.constant 0 : i32
    %c0_i32_1 = arith.constant 0 : i32
    return %c0_i32, %c0_i32_0 : i32, i32
  }
  func.func @transform_5(%arg0: i32) -> (i32, i32) {
    %c0_i32 = arith.constant 0 : i32
    %c0_i32_0 = arith.constant 0 : i32
    %c0_i32_1 = arith.constant 0 : i32
    return %c0_i32, %c0_i32_0 : i32, i32
  }
  func.func @transform_6(%arg0: i32) -> (i32, i32) {
    %c0_i32 = arith.constant 0 : i32
    %c0_i32_0 = arith.constant 0 : i32
    %c0_i32_1 = arith.constant 0 : i32
    return %c0_i32, %c0_i32_0 : i32, i32
  }
  func.func @transform_7(%arg0: i32) -> (i32, i32) {
    %c0_i32 = arith.constant 0 : i32
    %c0_i32_0 = arith.constant 0 : i32
    return %c0_i32, %arg0 : i32, i32
  }
}

</mosaic_0001>

<llo_original>
// kernel: cnn_diffusion_forward.1
$region0: #{cnn_diffusion_forward.1}
  #allocation0 [shape = 'u32[]', space=smem, size = 0x4, offset = 0x4, fixed_abs, tag = 'smem constant byte address 0x4 - core index']
  #allocation1 [shape = 'u32[144,128]{1,0:T(1,128)}', space=vmem, size = 0x12000, scoped, tag = 'internal scratch']
  %s0 = inlined_call_operand.vmem [shape: f32[1,2048], index: 0, kind: input, shape index: {}]
  %s1 = inlined_call_operand.vmem [shape: f32[16,4], index: 1, kind: input, shape index: {}]
  %s2 = inlined_call_operand.vmem [shape: f32[32,49], index: 2, kind: input, shape index: {}]
  %s3 = inlined_call_operand.vmem [shape: f32[64,97], index: 3, kind: input, shape index: {}]
  %s4 = inlined_call_operand.vmem [shape: f32[64,513], index: 4, kind: input, shape index: {}]
  %s5 = inlined_call_operand.vmem [shape: f32[32,65], index: 5, kind: input, shape index: {}]
  %s6 = inlined_call_operand.vmem [shape: f32[3,33], index: 6, kind: input, shape index: {}]
  %s7 = inlined_call_operand.hbm [shape: f32[3,256], index: 7, kind: output, shape index: {}]
  %s8 = sld [smem:[#allocation0]]
  $region61: #{cnn_diffusion_forward.1} parent=0
    _
  %s10 = ssub.s32 1, %s8
  %s11 = scalar_select 0, %s10, %s8
  $region1: #{cnn_diffusion_forward.1} parent=0
    #allocation2 [shape = 'u8[4096]{0}', space=vmem, size = 0x1000, scoped, tag = 'output window, operand 0']
    #allocation3 [shape = 's32[2]{0}', space=sflag, size = 0x8, scoped, tag = 'scoped memory for cnn_diffusion_forward.1']
    %12 = vsyncpa [#allocation3], 0
    %s13 = scalar_lea.sflag [#allocation3], 1
    %14 = vsyncpa %s13, 0
    loop: start=0, step=1, limit=4
    $region2: #{cnn_diffusion_forward.1} parent=1 // loop_pre_header
      _
    $region3: #{cnn_diffusion_forward.1} parent=1 // loop_header
      %s16 = sphi 0, %s20
      %p17 = scmp.ge.s32.totalorder %s16, 4
      %s26 = sphi 0, %s28
      %s29 = sphi 0, %s26
      %s30 = sphi 0, %s29
      %s46 = sphi 0, %s30
      %s50 = sphi 0, %s50
      %s52 = sphi 0, %s50
      %s53 = sphi 0, %s52
      %s67 = sphi 0, %s53
      %s71 = sphi 0, %s71
      %s73 = sphi 0, %s71
      %s74 = sphi 0, %s73
      %s88 = sphi 0, %s74
      %s92 = sphi 0, %s92
      %s94 = sphi 0, %s92
      %s95 = sphi 0, %s94
      %s109 = sphi 0, %s95
      %s113 = sphi 0, %s113
      %s115 = sphi 0, %s113
      %s116 = sphi 0, %s115
      %s130 = sphi 0, %s116
      %s134 = sphi 0, %s134
      %s136 = sphi 0, %s134
      %s137 = sphi 0, %s136
      %s151 = sphi 0, %s137
      %s155 = sphi 0, %s155
      %s157 = sphi 0, %s155
      %s158 = sphi 0, %s157
      %s172 = sphi 0, %s158
      %s178 = sphi 0, %s180
      %s181 = sphi 0, %s178
      %s182 = sphi 0, %s181
      %s198 = sphi 0, %s182
    $region4: #{cnn_diffusion_forward.1} parent=1 // loop_header_branch
      %19 = sbr.rel (%p17) target = $region8
    $region5: #{cnn_diffusion_forward.1} parent=1 // loop_body
      %s21 = ssub.s32 %s16, 1
      %s22 = ssub.s32 %s16, 2
      %s23 = sadd.s32 %s16, 1
      %s24 = ssub.s32 %s16, %s23
      %p25 = scmp.eq.s32.totalorder %s24, 0
      %s27 = sadd.s32 %s26, 1
      %s28 = scalar_select %p25, %s26, %s27
      %p31 = pneg %p25
      %p32 = scmp.eq.s32.totalorder %s16, 1
      %p33 = por %p31, %p32
      %p34 = scmp.ne.s32.totalorder %s26, %s29
      %p35 = scmp.eq.s32.totalorder %s16, 0
      %p36 = por %p34, %p35
      %p37 = scmp.ne.s32.totalorder %s26, %s29
      %p38 = scmp.eq.s32.totalorder %s21, 1
      %p39 = por %p37, %p38
      %p40 = scmp.ne.s32.totalorder %s29, %s30
      %p41 = scmp.eq.s32.totalorder %s21, 0
      %p42 = por %p40, %p41
      %p43 = scmp.ne.s32.totalorder %s29, %s30
      %p44 = scmp.eq.s32.totalorder %s22, 1
      %p45 = por %p43, %p44
      %p47 = scmp.ne.s32.totalorder %s30, %s46
      %p48 = scmp.eq.s32.totalorder %s22, 0
      %p49 = por %p47, %p48
      %s51 = sadd.s32 %s50, 1
      %p54 = scmp.eq.s32.totalorder %s16, 1
      %p55 = scmp.ne.s32.totalorder %s50, %s52
      %p56 = scmp.eq.s32.totalorder %s16, 0
      %p57 = por %p55, %p56
      %p58 = scmp.ne.s32.totalorder %s50, %s52
      %p59 = scmp.eq.s32.totalorder %s21, 1
      %p60 = por %p58, %p59
      %p61 = scmp.ne.s32.totalorder %s52, %s53
      %p62 = scmp.eq.s32.totalorder %s21, 0
      %p63 = por %p61, %p62
      %p64 = scmp.ne.s32.totalorder %s52, %s53
      %p65 = scmp.eq.s32.totalorder %s22, 1
      %p66 = por %p64, %p65
      %p68 = scmp.ne.s32.totalorder %s53, %s67
      %p69 = scmp.eq.s32.totalorder %s22, 0
      %p70 = por %p68, %p69
      %s72 = sadd.s32 %s71, 1
      %p75 = scmp.eq.s32.totalorder %s16, 1
      %p76 = scmp.ne.s32.totalorder %s71, %s73
      %p77 = scmp.eq.s32.totalorder %s16, 0
      %p78 = por %p76, %p77
      %p79 = scmp.ne.s32.totalorder %s71, %s73
      %p80 = scmp.eq.s32.totalorder %s21, 1
      %p81 = por %p79, %p80
      %p82 = scmp.ne.s32.totalorder %s73, %s74
      %p83 = scmp.eq.s32.totalorder %s21, 0
      %p84 = por %p82, %p83
      %p85 = scmp.ne.s32.totalorder %s73, %s74
      %p86 = scmp.eq.s32.totalorder %s22, 1
      %p87 = por %p85, %p86
      %p89 = scmp.ne.s32.totalorder %s74, %s88
      %p90 = scmp.eq.s32.totalorder %s22, 0
      %p91 = por %p89, %p90
      %s93 = sadd.s32 %s92, 1
      %p96 = scmp.eq.s32.totalorder %s16, 1
      %p97 = scmp.ne.s32.totalorder %s92, %s94
      %p98 = scmp.eq.s32.totalorder %s16, 0
      %p99 = por %p97, %p98
      %p100 = scmp.ne.s32.totalorder %s92, %s94
      %p101 = scmp.eq.s32.totalorder %s21, 1
      %p102 = por %p100, %p101
      %p103 = scmp.ne.s32.totalorder %s94, %s95
      %p104 = scmp.eq.s32.totalorder %s21, 0
      %p105 = por %p103, %p104
      %p106 = scmp.ne.s32.totalorder %s94, %s95
      %p107 = scmp.eq.s32.totalorder %s22, 1
      %p108 = por %p106, %p107
      %p110 = scmp.ne.s32.totalorder %s95, %s109
      %p111 = scmp.eq.s32.totalorder %s22, 0
      %p112 = por %p110, %p111
      %s114 = sadd.s32 %s113, 1
      %p117 = scmp.eq.s32.totalorder %s16, 1
      %p118 = scmp.ne.s32.totalorder %s113, %s115
      %p119 = scmp.eq.s32.totalorder %s16, 0
      %p120 = por %p118, %p119
      %p121 = scmp.ne.s32.totalorder %s113, %s115
      %p122 = scmp.eq.s32.totalorder %s21, 1
      %p123 = por %p121, %p122
      %p124 = scmp.ne.s32.totalorder %s115, %s116
      %p125 = scmp.eq.s32.totalorder %s21, 0
      %p126 = por %p124, %p125
      %p127 = scmp.ne.s32.totalorder %s115, %s116
      %p128 = scmp.eq.s32.totalorder %s22, 1
      %p129 = por %p127, %p128
      %p131 = scmp.ne.s32.totalorder %s116, %s130
      %p132 = scmp.eq.s32.totalorder %s22, 0
      %p133 = por %p131, %p132
      %s135 = sadd.s32 %s134, 1
      %p138 = scmp.eq.s32.totalorder %s16, 1
      %p139 = scmp.ne.s32.totalorder %s134, %s136
      %p140 = scmp.eq.s32.totalorder %s16, 0
      %p141 = por %p139, %p140
      %p142 = scmp.ne.s32.totalorder %s134, %s136
      %p143 = scmp.eq.s32.totalorder %s21, 1
      %p144 = por %p142, %p143
      %p145 = scmp.ne.s32.totalorder %s136, %s137
      %p146 = scmp.eq.s32.totalorder %s21, 0
      %p147 = por %p145, %p146
      %p148 = scmp.ne.s32.totalorder %s136, %s137
      %p149 = scmp.eq.s32.totalorder %s22, 1
      %p150 = por %p148, %p149
      %p152 = scmp.ne.s32.totalorder %s137, %s151
      %p153 = scmp.eq.s32.totalorder %s22, 0
      %p154 = por %p152, %p153
      %s156 = sadd.s32 %s155, 1
      %p159 = scmp.eq.s32.totalorder %s16, 1
      %p160 = scmp.ne.s32.totalorder %s155, %s157
      %p161 = scmp.eq.s32.totalorder %s16, 0
      %p162 = por %p160, %p161
      %p163 = scmp.ne.s32.totalorder %s155, %s157
      %p164 = scmp.eq.s32.totalorder %s21, 1
      %p165 = por %p163, %p164
      %p166 = scmp.ne.s32.totalorder %s157, %s158
      %p167 = scmp.eq.s32.totalorder %s21, 0
      %p168 = por %p166, %p167
      %p169 = scmp.ne.s32.totalorder %s157, %s158
      %p170 = scmp.eq.s32.totalorder %s22, 1
      %p171 = por %p169, %p170
      %p173 = scmp.ne.s32.totalorder %s158, %s172
      %p174 = scmp.eq.s32.totalorder %s22, 0
      %p175 = por %p173, %p174
      %s176 = ssub.s32 %s16, %s23
      %p177 = scmp.eq.s32.totalorder %s176, 0
      %s179 = sadd.s32 %s178, 1
      %s180 = scalar_select %p177, %s178, %s179
      %p183 = pneg %p177
      %p184 = scmp.eq.s32.totalorder %s16, 1
      %p185 = por %p183, %p184
      %p186 = scmp.ne.s32.totalorder %s178, %s181
      %p187 = scmp.eq.s32.totalorder %s16, 0
      %p188 = por %p186, %p187
      %p189 = scmp.ne.s32.totalorder %s178, %s181
      %p190 = scmp.eq.s32.totalorder %s21, 1
      %p191 = por %p189, %p190
      %p192 = scmp.ne.s32.totalorder %s181, %s182
      %p193 = scmp.eq.s32.totalorder %s21, 0
      %p194 = por %p192, %p193
      %p195 = scmp.ne.s32.totalorder %s181, %s182
      %p196 = scmp.eq.s32.totalorder %s22, 1
      %p197 = por %p195, %p196
      %p199 = scmp.ne.s32.totalorder %s182, %s198
      %p200 = scmp.eq.s32.totalorder %s22, 0
      %p201 = por %p199, %p200
      %p202 = scmp.le.s32.totalorder 1, %s16
      %p203 = scmp.lt.s32.totalorder %s16, 3
      %p204 = pnand %p202, %p203
      %p205 = pneg %p204
      // Predicated region
      $region9: #{cnn_diffusion_forward.1} parent=5 // pred_check
        _
      $region10: #{cnn_diffusion_forward.1} parent=5 // pred_check_branch
        %207 = sbr.rel (%p204) target = $region12
      $region11: #{cnn_diffusion_forward.1} parent=5 // pred_region
        %s208 = ssub.s32 %s16, 1
        // Predicated region
        $region13: #{cnn_diffusion_forward.1} parent=11 // pred_check
          %p209 = pneg %p63
        $region14: #{cnn_diffusion_forward.1} parent=11 // pred_check_branch
          %211 = sbr.rel (%p209) target = $region16
        $region15: #{cnn_diffusion_forward.1} parent=11 // pred_region
          _
        $region16: #{cnn_diffusion_forward.1} parent=11 // pred_fallthru
          _
        // Predicated region
        $region17: #{cnn_diffusion_forward.1} parent=11 // pred_check
          %p212 = pneg %p84
        $region18: #{cnn_diffusion_forward.1} parent=11 // pred_check_branch
          %214 = sbr.rel (%p212) target = $region20
        $region19: #{cnn_diffusion_forward.1} parent=11 // pred_region
          _
        $region20: #{cnn_diffusion_forward.1} parent=11 // pred_fallthru
          _
        // Predicated region
        $region21: #{cnn_diffusion_forward.1} parent=11 // pred_check
          %p215 = pneg %p105
        $region22: #{cnn_diffusion_forward.1} parent=11 // pred_check_branch
          %217 = sbr.rel (%p215) target = $region24
        $region23: #{cnn_diffusion_forward.1} parent=11 // pred_region
          _
        $region24: #{cnn_diffusion_forward.1} parent=11 // pred_fallthru
          _
        // Predicated region
        $region25: #{cnn_diffusion_forward.1} parent=11 // pred_check
          %p218 = pneg %p126
        $region26: #{cnn_diffusion_forward.1} parent=11 // pred_check_branch
          %220 = sbr.rel (%p218) target = $region28
        $region27: #{cnn_diffusion_forward.1} parent=11 // pred_region
          _
        $region28: #{cnn_diffusion_forward.1} parent=11 // pred_fallthru
          _
        // Predicated region
        $region29: #{cnn_diffusion_forward.1} parent=11 // pred_check
          %p221 = pneg %p147
        $region30: #{cnn_diffusion_forward.1} parent=11 // pred_check_branch
          %223 = sbr.rel (%p221) target = $region32
        $region31: #{cnn_diffusion_forward.1} parent=11 // pred_region
          _
        $region32: #{cnn_diffusion_forward.1} parent=11 // pred_fallthru
          _
        // Predicated region
        $region33: #{cnn_diffusion_forward.1} parent=11 // pred_check
          %p224 = pneg %p168
        $region34: #{cnn_diffusion_forward.1} parent=11 // pred_check_branch
          %226 = sbr.rel (%p224) target = $region36
        $region35: #{cnn_diffusion_forward.1} parent=11 // pred_region
          _
        $region36: #{cnn_diffusion_forward.1} parent=11 // pred_fallthru
          _
      $region12: #{cnn_diffusion_forward.1} parent=5 // pred_fallthru
        _
      %p227 = scmp.lt.s32.totalorder %s16, 2
      // Predicated region
      $region37: #{cnn_diffusion_forward.1} parent=5 // pred_check
        %p228 = pneg %p227
      $region38: #{cnn_diffusion_forward.1} parent=5 // pred_check_branch
        %230 = sbr.rel (%p228) target = $region40
      $region39: #{cnn_diffusion_forward.1} parent=5 // pred_region
        // Predicated region
        $region41: #{cnn_diffusion_forward.1} parent=39 // pred_check
          %p231 = pneg %p36
        $region42: #{cnn_diffusion_forward.1} parent=39 // pred_check_branch
          %233 = sbr.rel (%p231) target = $region44
        $region43: #{cnn_diffusion_forward.1} parent=39 // pred_region
          %s234 = smul.u32 8, %s16
          %p235 = scmp.lt.s32.totalorder %s234, 15
          %s236 = scalar_select %p235, %s234, 15
          %s237 = scalar_lea.vmem %s0, %s236
          %s238 = smul.u32 8, %s16
        $region44: #{cnn_diffusion_forward.1} parent=39 // pred_fallthru
          _
      $region40: #{cnn_diffusion_forward.1} parent=5 // pred_fallthru
        _
      %p239 = scmp.le.s32.totalorder 1, %s16
      %p240 = scmp.lt.s32.totalorder %s16, 3
      %p241 = pnand %p239, %p240
      %p242 = pneg %p241
      // Predicated region
      $region45: #{cnn_diffusion_forward.1} parent=5 // pred_check
        _
      $region46: #{cnn_diffusion_forward.1} parent=5 // pred_check_branch
        %244 = sbr.rel (%p241) target = $region48
      $region47: #{cnn_diffusion_forward.1} parent=5 // pred_region
        %s245 = ssub.s32 %s16, 1
        %s246 = smul.u32 8, %s21
        %p247 = scmp.lt.s32.totalorder %s246, 15
        %s248 = scalar_select %p247, %s246, 15
        %s249 = scalar_lea.vmem %s0, %s248
        %p250 = pneg %p42
        %p251 = pneg %p39
        %p252 = pneg %p63
        %p253 = pneg %p60
        %p254 = pneg %p84
        %p255 = pneg %p81
        %p256 = pneg %p105
        %p257 = pneg %p102
        %p258 = pneg %p126
        %p259 = pneg %p123
        %p260 = pneg %p147
        %p261 = pneg %p144
        %p262 = pneg %p168
        %p263 = pneg %p165
        %p264 = pneg %p194
        %p265 = pneg %p191
        %s266 = sand.u32 %s181, 1
        %s267 = scalar_lea.sflag [#allocation3], %s266
        %s268 = sand.u32 %s181, 1
        %s269 = smul.addr %s268, 4
        %s270 = scalar_lea.vmem [#allocation2], %s269
        %s271 = smul.u32 8, %s21
        %p272 = scmp.lt.s32.totalorder %s271, 15
        %s273 = scalar_select %p272, %s271, 15
        %s274 = scalar_lea.vmem %s0, %s273
        %s275 = smul.u32 8, %s21
        %v276 = vld [vmem:[%s274] sm:$0xff]
        %v277 = vld [vmem:[%s1] sm:$0xff]
        %v278 = vld [vmem:[%s1 + $0x8] sm:$0xff]
        %v280 = vlaneseq
        %v281 = vshrl.u32 %v280, 7
        %v282 = vsub.s32 0, %v281
        %v283 = vrot.slane %v276, %v282
        %v284 = vlaneseq
        %v285 = vshrl.u32 %v284, 7
        %v286 = vsub.s32 1, %v285
        %v287 = vrot.slane %v276, %v286
        %v288 = vlaneseq
        %v289 = vshrl.u32 %v288, 7
        %v290 = vsub.s32 2, %v289
        %v291 = vrot.slane %v276, %v290
        %v292 = vlaneseq
        %v293 = vshrl.u32 %v292, 7
        %v294 = vsub.s32 3, %v293
        %v295 = vrot.slane %v276, %v294
        %v296 = vlaneseq
        %v297 = vshrl.u32 %v296, 7
        %v298 = vsub.s32 4, %v297
        %v299 = vrot.slane %v276, %v298
        %v300 = vlaneseq
        %v301 = vshrl.u32 %v300, 7
        %v302 = vsub.s32 5, %v301
        %v303 = vrot.slane %v276, %v302
        %v304 = vlaneseq
        %v305 = vshrl.u32 %v304, 7
        %v306 = vsub.s32 6, %v305
        %v307 = vrot.slane %v276, %v306
        %316 = vset.pattern.permute.xlu0 0
        %317 = vperm.xlu0 %316, %v277
        %v318 = vpop.permute.xlu0 %317
        %321 = vset.pattern.permute.xlu0 0
        %322 = vperm.xlu0 %321, %v278
        %v323 = vpop.permute.xlu0 %322
        %v325 = vlaneseq
        %v326 = vshrl.u32 %v325, 7
        %v327 = vsub.s32 0, %v326
        %v328 = vlaneseq
        %v329 = vshrl.u32 %v328, 7
        %v330 = vsub.s32 0, %v329
        %v331 = vrot.slane %v283, %v330
        %v332 = vlaneseq
        %v333 = vshrl.u32 %v332, 7
        %v334 = vsub.s32 0, %v333
        %v335 = vrot.slane %v287, %v334
        %v336 = vlaneseq
        %v337 = vshrl.u32 %v336, 7
        %v338 = vsub.s32 0, %v337
        %v339 = vrot.slane %v291, %v338
        %v340 = vlaneseq
        %v341 = vshrl.u32 %v340, 7
        %v342 = vsub.s32 0, %v341
        %v343 = vrot.slane %v295, %v342
        %v344 = vlaneseq
        %v345 = vshrl.u32 %v344, 7
        %v346 = vsub.s32 0, %v345
        %v347 = vrot.slane %v299, %v346
        %v348 = vlaneseq
        %v349 = vshrl.u32 %v348, 7
        %v350 = vsub.s32 0, %v349
        %v351 = vrot.slane %v303, %v350
        %v352 = vlaneseq
        %v353 = vshrl.u32 %v352, 7
        %v354 = vsub.s32 0, %v353
        %v355 = vrot.slane %v307, %v354
        %v356 = vmul.f32 %v318, 0.0
        %v357 = vmul.f32 %v318, %v331
        %v358 = vmul.f32 %v318, %v335
        %v359 = vmul.f32 %v318, %v339
        %v360 = vmul.f32 %v318, %v343
        %v361 = vmul.f32 %v318, %v347
        %v362 = vmul.f32 %v318, %v351
        %v363 = vmul.f32 %v318, %v355
        %v364 = vmul.f32 %v323, 0.0
        %v365 = vmul.f32 %v323, %v331
        %v366 = vmul.f32 %v323, %v335
        %v367 = vmul.f32 %v323, %v339
        %v368 = vmul.f32 %v323, %v343
        %v369 = vmul.f32 %v323, %v347
        %v370 = vmul.f32 %v323, %v351
        %v371 = vmul.f32 %v323, %v355
        %372 = vset.pattern.permute.xlu0 1
        %373 = vperm.xlu0 %372, %v277
        %v374 = vpop.permute.xlu0 %373
        %376 = vset.pattern.permute.xlu0 1
        %377 = vperm.xlu0 %376, %v278
        %v378 = vpop.permute.xlu0 %377
        %v380 = vlaneseq
        %v381 = vshrl.u32 %v380, 7
        %v382 = vsub.s32 7, %v381
        %v383 = vrot.slane %v276, %v382
        %v385 = vmul.f32 %v374, %v283
        %v386 = vmul.f32 %v374, %v287
        %v387 = vmul.f32 %v374, %v291
        %v388 = vmul.f32 %v374, %v295
        %v389 = vmul.f32 %v374, %v299
        %v390 = vmul.f32 %v374, %v303
        %v391 = vmul.f32 %v374, %v307
        %v392 = vmul.f32 %v374, %v383
        %v393 = vmul.f32 %v378, %v283
        %v394 = vmul.f32 %v378, %v287
        %v395 = vmul.f32 %v378, %v291
        %v396 = vmul.f32 %v378, %v295
        %v397 = vmul.f32 %v378, %v299
        %v398 = vmul.f32 %v378, %v303
        %v399 = vmul.f32 %v378, %v307
        %v400 = vmul.f32 %v378, %v383
        %v401 = vadd.f32 %v356, %v385
        %v402 = vadd.f32 %v357, %v386
        %v403 = vadd.f32 %v358, %v387
        %v404 = vadd.f32 %v359, %v388
        %v405 = vadd.f32 %v360, %v389
        %v406 = vadd.f32 %v361, %v390
        %v407 = vadd.f32 %v362, %v391
        %v408 = vadd.f32 %v363, %v392
        %v409 = vadd.f32 %v364, %v393
        %v410 = vadd.f32 %v365, %v394
        %v411 = vadd.f32 %v366, %v395
        %v412 = vadd.f32 %v367, %v396
        %v413 = vadd.f32 %v368, %v397
        %v414 = vadd.f32 %v369, %v398
        %v415 = vadd.f32 %v370, %v399
        %v416 = vadd.f32 %v371, %v400
        %417 = vset.pattern.permute.xlu0 2
        %418 = vperm.xlu0 %417, %v277
        %v419 = vpop.permute.xlu0 %418
        %421 = vset.pattern.permute.xlu0 2
        %422 = vperm.xlu0 %421, %v278
        %v423 = vpop.permute.xlu0 %422
        %v425 = vlaneseq
        %v426 = vshrl.u32 %v425, 7
        %v427 = vsub.s32 0, %v426
        %v428 = vrot.slane %v383, %v427
        %v429 = vmul.f32 %v419, %v335
        %v430 = vmul.f32 %v419, %v339
        %v431 = vmul.f32 %v419, %v343
        %v432 = vmul.f32 %v419, %v347
        %v433 = vmul.f32 %v419, %v351
        %v434 = vmul.f32 %v419, %v355
        %v435 = vmul.f32 %v419, %v428
        %v436 = vmul.f32 %v419, 0.0
        %v437 = vmul.f32 %v423, %v335
        %v438 = vmul.f32 %v423, %v339
        %v439 = vmul.f32 %v423, %v343
        %v440 = vmul.f32 %v423, %v347
        %v441 = vmul.f32 %v423, %v351
        %v442 = vmul.f32 %v423, %v355
        %v443 = vmul.f32 %v423, %v428
        %v444 = vmul.f32 %v423, 0.0
        %v445 = vadd.f32 %v401, %v429
        %v446 = vadd.f32 %v402, %v430
        %v447 = vadd.f32 %v403, %v431
        %v448 = vadd.f32 %v404, %v432
        %v449 = vadd.f32 %v405, %v433
        %v450 = vadd.f32 %v406, %v434
        %v451 = vadd.f32 %v407, %v435
        %v452 = vadd.f32 %v408, %v436
        %v453 = vadd.f32 %v409, %v437
        %v454 = vadd.f32 %v410, %v438
        %v455 = vadd.f32 %v411, %v439
        %v456 = vadd.f32 %v412, %v440
        %v457 = vadd.f32 %v413, %v441
        %v458 = vadd.f32 %v414, %v442
        %v459 = vadd.f32 %v415, %v443
        %v460 = vadd.f32 %v416, %v444
        %461 = vset.pattern.permute.xlu0 3
        %462 = vperm.xlu0 %461, %v277
        %v463 = vpop.permute.xlu0 %462
        %465 = vset.pattern.permute.xlu0 3
        %466 = vperm.xlu0 %465, %v278
        %v467 = vpop.permute.xlu0 %466
        %v469 = vadd.f32 %v445, %v463
        %v470 = vadd.f32 %v446, %v463
        %v471 = vadd.f32 %v447, %v463
        %v472 = vadd.f32 %v448, %v463
        %v473 = vadd.f32 %v449, %v463
        %v474 = vadd.f32 %v450, %v463
        %v475 = vadd.f32 %v451, %v463
        %v476 = vadd.f32 %v452, %v463
        %v477 = vadd.f32 %v453, %v467
        %v478 = vadd.f32 %v454, %v467
        %v479 = vadd.f32 %v455, %v467
        %v480 = vadd.f32 %v456, %v467
        %v481 = vadd.f32 %v457, %v467
        %v482 = vadd.f32 %v458, %v467
        %v483 = vadd.f32 %v459, %v467
        %v484 = vadd.f32 %v460, %v467
        %vm485 = vcmp.gt.f32.partialorder %v469, 0.0
        %vm486 = vcmp.gt.f32.partialorder %v470, 0.0
        %vm487 = vcmp.gt.f32.partialorder %v471, 0.0
        %vm488 = vcmp.gt.f32.partialorder %v472, 0.0
        %vm489 = vcmp.gt.f32.partialorder %v473, 0.0
        %vm490 = vcmp.gt.f32.partialorder %v474, 0.0
        %vm491 = vcmp.gt.f32.partialorder %v475, 0.0
        %vm492 = vcmp.gt.f32.partialorder %v476, 0.0
        %vm493 = vcmp.gt.f32.partialorder %v477, 0.0
        %vm494 = vcmp.gt.f32.partialorder %v478, 0.0
        %vm495 = vcmp.gt.f32.partialorder %v479, 0.0
        %vm496 = vcmp.gt.f32.partialorder %v480, 0.0
        %vm497 = vcmp.gt.f32.partialorder %v481, 0.0
        %vm498 = vcmp.gt.f32.partialorder %v482, 0.0
        %vm499 = vcmp.gt.f32.partialorder %v483, 0.0
        %vm500 = vcmp.gt.f32.partialorder %v484, 0.0
        %v501 = vmul.f32 %v469, 0.1
        %v502 = vmul.f32 %v470, 0.1
        %v503 = vmul.f32 %v471, 0.1
        %v504 = vmul.f32 %v472, 0.1
        %v505 = vmul.f32 %v473, 0.1
        %v506 = vmul.f32 %v474, 0.1
        %v507 = vmul.f32 %v475, 0.1
        %v508 = vmul.f32 %v476, 0.1
        %v509 = vmul.f32 %v477, 0.1
        %v510 = vmul.f32 %v478, 0.1
        %v511 = vmul.f32 %v479, 0.1
        %v512 = vmul.f32 %v480, 0.1
        %v513 = vmul.f32 %v481, 0.1
        %v514 = vmul.f32 %v482, 0.1
        %v515 = vmul.f32 %v483, 0.1
        %v516 = vmul.f32 %v484, 0.1
        %v517 = vsel %vm485, %v469, %v501
        %v518 = vsel %vm486, %v470, %v502
        %v519 = vsel %vm487, %v471, %v503
        %v520 = vsel %vm488, %v472, %v504
        %v521 = vsel %vm489, %v473, %v505
        %v522 = vsel %vm490, %v474, %v506
        %v523 = vsel %vm491, %v475, %v507
        %v524 = vsel %vm492, %v476, %v508
        %v525 = vsel %vm493, %v477, %v509
        %v526 = vsel %vm494, %v478, %v510
        %v527 = vsel %vm495, %v479, %v511
        %v528 = vsel %vm496, %v480, %v512
        %v529 = vsel %vm497, %v481, %v513
        %v530 = vsel %vm498, %v482, %v514
        %v531 = vsel %vm499, %v483, %v515
        %v532 = vsel %vm500, %v484, %v516
        %v533 = vld [vmem:[%s2] sm:$0xff]
        %v534 = vld [vmem:[%s2 + $0x8] sm:$0xff]
        %v535 = vld [vmem:[%s2 + $0x10] sm:$0xff]
        %v536 = vld [vmem:[%s2 + $0x18] sm:$0xff]
        %538 = vset.pattern.permute.xlu0 48
        %539 = vperm.xlu0 %538, %v533
        %v540 = vpop.permute.xlu0 %539
        %543 = vset.pattern.permute.xlu0 48
        %544 = vperm.xlu0 %543, %v534
        %v545 = vpop.permute.xlu0 %544
        %548 = vset.pattern.permute.xlu0 48
        %549 = vperm.xlu0 %548, %v535
        %v550 = vpop.permute.xlu0 %549
        %553 = vset.pattern.permute.xlu0 48
        %554 = vperm.xlu0 %553, %v536
        %v555 = vpop.permute.xlu0 %554
        %vm557 = vcmask 392192
        %v558 = vsel %vm557, %v533, 0
        %v560 = vsel %vm557, %v534, 0
        %v562 = vsel %vm557, %v535, 0
        %v564 = vsel %vm557, %v536, 0
        %566 = vmatprep.subr.mxu0 %v517
        %567 = vmatpush1.msra.mxu0 0.0
        %568 = vmatprep.subr.mxu0 %v525
        %569 = vmatpush1.msra.mxu0 0.0
        %570 = vmatprep.subr.mxu0 %v518
        %571 = vmatpush1.msra.mxu0 %v517
        %572 = vmatprep.subr.mxu0 %v526
        %573 = vmatpush1.msra.mxu0 %v525
        %574 = vmatprep.subr.mxu0 %v519
        %575 = vmatpush1.msra.mxu0 %v518
        %576 = vmatprep.subr.mxu0 %v527
        %577 = vmatpush1.msra.mxu0 %v526
        %578 = vmatprep.subr.mxu0 0.0
        %579 = vmatpush1.msra.mxu0 0.0
        %580 = vmatprep.subr.mxu0 0.0
        %581 = vmatpush1.msra.mxu0 0.0
        %582 = vmatprep.subr.mxu0 0.0
        %583 = vmatpush1.msra.mxu0 0.0
        %584 = vmatprep.subr.mxu0 0.0
        %585 = vmatpush1.msra.mxu0 0.0
        %586 = vmatprep.subr.mxu0 0.0
        %587 = vmatpush1.msra.mxu0 0.0
        %588 = vmatprep.subr.mxu0 0.0
        %589 = vmatpush1.msra.mxu0 0.0
        %590 = vmatprep.subr.mxu0 0.0
        %591 = vmatpush1.msra.mxu0 0.0
        %592 = vmatprep.subr.mxu0 0.0
        %593 = vmatpush1.msra.mxu0 0.0
        %594 = vmatprep.subr.mxu0 0.0
        %595 = vmatpush1.msra.mxu0 0.0
        %596 = vmatprep.subr.mxu0 0.0
        %597 = vmatpush1.msra.mxu0 0.0
        %598 = vmatprep.subr.mxu0 0.0
        %599 = vmatpush1.msra.mxu0 0.0
        %600 = vmatprep.subr.mxu0 0.0
        %601 = vmatpush1.msra.mxu0 0.0
        %602 = vmatprep.subr.mxu0 0.0
        %603 = vmatpush1.msra.mxu0 0.0
        %604 = vmatprep.subr.mxu0 0.0
        %605 = vmatpush1.msra.mxu0 0.0
        %606 = vmatprep.subr.mxu0 0.0
        %607 = vmatpush1.msra.mxu0 0.0
        %608 = vmatprep.subr.mxu0 0.0
        %609 = vmatpush1.msra.mxu0 0.0
        %610 = vmatprep.subr.mxu0 0.0
        %611 = vmatpush1.msra.mxu0 0.0
        %612 = vmatprep.subr.mxu0 0.0
        %613 = vmatpush1.msra.mxu0 0.0
        %614 = vmatprep.subr.mxu0 0.0
        %615 = vmatpush1.msra.mxu0 0.0
        %616 = vmatprep.subr.mxu0 0.0
        %617 = vmatpush1.msra.mxu0 0.0
        %618 = vmatprep.subr.mxu0 0.0
        %619 = vmatpush1.msra.mxu0 0.0
        %620 = vmatprep.subr.mxu0 0.0
        %621 = vmatpush1.msra.mxu0 0.0
        %622 = vmatprep.subr.mxu0 0.0
        %623 = vmatpush1.msra.mxu0 0.0
        %624 = vmatprep.subr.mxu0 0.0
        %625 = vmatpush1.msra.mxu0 0.0
        %626 = vmatprep.subr.mxu0 0.0
        %627 = vmatpush1.msra.mxu0 0.0
        %628 = vmatprep.subr.mxu0 0.0
        %629 = vmatpush1.msra.mxu0 0.0
        %630 = vmatprep.mubr.f32.mxu0 0.0
        %631 = vmatmul.mubr.f32.gmra.mrb[0].mxu0 %v558
        %v632 = vpop.f32.mrb[0].mxu0
        %v633 = vadd.f32 %v540, %v632
        %v634 = vpop.f32.mrb[0].mxu0
        %v635 = vadd.f32 %v540, %v634
        %636 = vmatprep.mubr.f32.mxu0 0.0
        %637 = vmatmul.mubr.f32.gmra.mrb[0].mxu0 %v560
        %v638 = vpop.f32.mrb[0].mxu0
        %v639 = vadd.f32 %v545, %v638
        %v640 = vpop.f32.mrb[0].mxu0
        %v641 = vadd.f32 %v545, %v640
        %642 = vmatprep.mubr.f32.mxu0 0.0
        %643 = vmatmul.mubr.f32.gmra.mrb[0].mxu0 %v562
        %v644 = vpop.f32.mrb[0].mxu0
        %v645 = vadd.f32 %v550, %v644
        %v646 = vpop.f32.mrb[0].mxu0
        %v647 = vadd.f32 %v550, %v646
        %648 = vmatprep.mubr.f32.mxu0 0.0
        %649 = vmatmul.mubr.f32.gmra.mrb[0].mxu0 %v564
        %v650 = vpop.f32.mrb[0].mxu0
        %v651 = vadd.f32 %v555, %v650
        %v652 = vpop.f32.mrb[0].mxu0
        %v653 = vadd.f32 %v555, %v652
        %654 = vdwg.mxu0
        %655 = vmatprep.subr.mxu0 %v519
        %656 = vmatpush1.msra.mxu0 %v518
        %657 = vmatprep.subr.mxu0 %v527
        %658 = vmatpush1.msra.mxu0 %v526
        %659 = vmatprep.subr.mxu0 %v520
        %660 = vmatpush1.msra.mxu0 %v519
        %661 = vmatprep.subr.mxu0 %v528
        %662 = vmatpush1.msra.mxu0 %v527
        %663 = vmatprep.subr.mxu0 %v521
        %664 = vmatpush1.msra.mxu0 %v520
        %665 = vmatprep.subr.mxu0 %v529
        %666 = vmatpush1.msra.mxu0 %v528
        %667 = vmatprep.subr.mxu0 0.0
        %668 = vmatpush1.msra.mxu0 0.0
        %669 = vmatprep.subr.mxu0 0.0
        %670 = vmatpush1.msra.mxu0 0.0
        %671 = vmatprep.subr.mxu0 0.0
        %672 = vmatpush1.msra.mxu0 0.0
        %673 = vmatprep.subr.mxu0 0.0
        %674 = vmatpush1.msra.mxu0 0.0
        %675 = vmatprep.subr.mxu0 0.0
        %676 = vmatpush1.msra.mxu0 0.0
        %677 = vmatprep.subr.mxu0 0.0
        %678 = vmatpush1.msra.mxu0 0.0
        %679 = vmatprep.subr.mxu0 0.0
        %680 = vmatpush1.msra.mxu0 0.0
        %681 = vmatprep.subr.mxu0 0.0
        %682 = vmatpush1.msra.mxu0 0.0
        %683 = vmatprep.subr.mxu0 0.0
        %684 = vmatpush1.msra.mxu0 0.0
        %685 = vmatprep.subr.mxu0 0.0
        %686 = vmatpush1.msra.mxu0 0.0
        %687 = vmatprep.subr.mxu0 0.0
        %688 = vmatpush1.msra.mxu0 0.0
        %689 = vmatprep.subr.mxu0 0.0
        %690 = vmatpush1.msra.mxu0 0.0
        %691 = vmatprep.subr.mxu0 0.0
        %692 = vmatpush1.msra.mxu0 0.0
        %693 = vmatprep.subr.mxu0 0.0
        %694 = vmatpush1.msra.mxu0 0.0
        %695 = vmatprep.subr.mxu0 0.0
        %696 = vmatpush1.msra.mxu0 0.0
        %697 = vmatprep.subr.mxu0 0.0
        %698 = vmatpush1.msra.mxu0 0.0
        %699 = vmatprep.subr.mxu0 0.0
        %700 = vmatpush1.msra.mxu0 0.0
        %701 = vmatprep.subr.mxu0 0.0
        %702 = vmatpush1.msra.mxu0 0.0
        %703 = vmatprep.subr.mxu0 0.0
        %704 = vmatpush1.msra.mxu0 0.0
        %705 = vmatprep.subr.mxu0 0.0
        %706 = vmatpush1.msra.mxu0 0.0
        %707 = vmatprep.subr.mxu0 0.0
        %708 = vmatpush1.msra.mxu0 0.0
        %709 = vmatprep.subr.mxu0 0.0
        %710 = vmatpush1.msra.mxu0 0.0
        %711 = vmatprep.subr.mxu0 0.0
        %712 = vmatpush1.msra.mxu0 0.0
        %713 = vmatprep.subr.mxu0 0.0
        %714 = vmatpush1.msra.mxu0 0.0
        %715 = vmatprep.subr.mxu0 0.0
        %716 = vmatpush1.msra.mxu0 0.0
        %717 = vmatprep.subr.mxu0 0.0
        %718 = vmatpush1.msra.mxu0 0.0
        %719 = vmatprep.mubr.f32.mxu0 0.0
        %720 = vmatmul.mubr.f32.gmra.mrb[0].mxu0 %v558
        %v721 = vpop.f32.mrb[0].mxu0
        %v722 = vadd.f32 %v540, %v721
        %v723 = vpop.f32.mrb[0].mxu0
        %v724 = vadd.f32 %v540, %v723
        %725 = vmatprep.mubr.f32.mxu0 0.0
        %726 = vmatmul.mubr.f32.gmra.mrb[0].mxu0 %v560
        %v727 = vpop.f32.mrb[0].mxu0
        %v728 = vadd.f32 %v545, %v727
        %v729 = vpop.f32.mrb[0].mxu0
        %v730 = vadd.f32 %v545, %v729
        %731 = vmatprep.mubr.f32.mxu0 0.0
        %732 = vmatmul.mubr.f32.gmra.mrb[0].mxu0 %v562
        %v733 = vpop.f32.mrb[0].mxu0
        %v734 = vadd.f32 %v550, %v733
        %v735 = vpop.f32.mrb[0].mxu0
        %v736 = vadd.f32 %v550, %v735
        %737 = vmatprep.mubr.f32.mxu0 0.0
        %738 = vmatmul.mubr.f32.gmra.mrb[0].mxu0 %v564
        %v739 = vpop.f32.mrb[0].mxu0
        %v740 = vadd.f32 %v555, %v739
        %v741 = vpop.f32.mrb[0].mxu0
        %v742 = vadd.f32 %v555, %v741
        %743 = vdwg.mxu0
        %744 = vmatprep.subr.mxu0 %v521
        %745 = vmatpush1.msra.mxu0 %v520
        %746 = vmatprep.subr.mxu0 %v529
        %747 = vmatpush1.msra.mxu0 %v528
        %748 = vmatprep.subr.mxu0 %v522
        %749 = vmatpush1.msra.mxu0 %v521
        %750 = vmatprep.subr.mxu0 %v530
        %751 = vmatpush1.msra.mxu0 %v529
        %752 = vmatprep.subr.mxu0 %v523
        %753 = vmatpush1.msra.mxu0 %v522
        %754 = vmatprep.subr.mxu0 %v531
        %755 = vmatpush1.msra.mxu0 %v530
        %756 = vmatprep.subr.mxu0 0.0
        %757 = vmatpush1.msra.mxu0 0.0
        %758 = vmatprep.subr.mxu0 0.0
        %759 = vmatpush1.msra.mxu0 0.0
        %760 = vmatprep.subr.mxu0 0.0
        %761 = vmatpush1.msra.mxu0 0.0
        %762 = vmatprep.subr.mxu0 0.0
        %763 = vmatpush1.msra.mxu0 0.0
        %764 = vmatprep.subr.mxu0 0.0
        %765 = vmatpush1.msra.mxu0 0.0
        %766 = vmatprep.subr.mxu0 0.0
        %767 = vmatpush1.msra.mxu0 0.0
        %768 = vmatprep.subr.mxu0 0.0
        %769 = vmatpush1.msra.mxu0 0.0
        %770 = vmatprep.subr.mxu0 0.0
        %771 = vmatpush1.msra.mxu0 0.0
        %772 = vmatprep.subr.mxu0 0.0
        %773 = vmatpush1.msra.mxu0 0.0
        %774 = vmatprep.subr.mxu0 0.0
        %775 = vmatpush1.msra.mxu0 0.0
        %776 = vmatprep.subr.mxu0 0.0
        %777 = vmatpush1.msra.mxu0 0.0
        %778 = vmatprep.subr.mxu0 0.0
        %779 = vmatpush1.msra.mxu0 0.0
        %780 = vmatprep.subr.mxu0 0.0
        %781 = vmatpush1.msra.mxu0 0.0
        %782 = vmatprep.subr.mxu0 0.0
        %783 = vmatpush1.msra.mxu0 0.0
        %784 = vmatprep.subr.mxu0 0.0
        %785 = vmatpush1.msra.mxu0 0.0
        %786 = vmatprep.subr.mxu0 0.0
        %787 = vmatpush1.msra.mxu0 0.0
        %788 = vmatprep.subr.mxu0 0.0
        %789 = vmatpush1.msra.mxu0 0.0
        %790 = vmatprep.subr.mxu0 0.0
        %791 = vmatpush1.msra.mxu0 0.0
        %792 = vmatprep.subr.mxu0 0.0
        %793 = vmatpush1.msra.mxu0 0.0
        %794 = vmatprep.subr.mxu0 0.0
        %795 = vmatpush1.msra.mxu0 0.0
        %796 = vmatprep.subr.mxu0 0.0
        %797 = vmatpush1.msra.mxu0 0.0
        %798 = vmatprep.subr.mxu0 0.0
        %799 = vmatpush1.msra.mxu0 0.0
        %800 = vmatprep.subr.mxu0 0.0
        %801 = vmatpush1.msra.mxu0 0.0
        %802 = vmatprep.subr.mxu0 0.0
        %803 = vmatpush1.msra.mxu0 0.0
        %804 = vmatprep.subr.mxu0 0.0
        %805 = vmatpush1.msra.mxu0 0.0
        %806 = vmatprep.subr.mxu0 0.0
        %807 = vmatpush1.msra.mxu0 0.0
        %808 = vmatprep.mubr.f32.mxu0 0.0
        %809 = vmatmul.mubr.f32.gmra.mrb[0].mxu0 %v558
        %v810 = vpop.f32.mrb[0].mxu0
        %v811 = vadd.f32 %v540, %v810
        %v812 = vpop.f32.mrb[0].mxu0
        %v813 = vadd.f32 %v540, %v812
        %814 = vmatprep.mubr.f32.mxu0 0.0
        %815 = vmatmul.mubr.f32.gmra.mrb[0].mxu0 %v560
        %v816 = vpop.f32.mrb[0].mxu0
        %v817 = vadd.f32 %v545, %v816
        %v818 = vpop.f32.mrb[0].mxu0
        %v819 = vadd.f32 %v545, %v818
        %820 = vmatprep.mubr.f32.mxu0 0.0
        %821 = vmatmul.mubr.f32.gmra.mrb[0].mxu0 %v562
        %v822 = vpop.f32.mrb[0].mxu0
        %v823 = vadd.f32 %v550, %v822
        %v824 = vpop.f32.mrb[0].mxu0
        %v825 = vadd.f32 %v550, %v824
        %826 = vmatprep.mubr.f32.mxu0 0.0
        %827 = vmatmul.mubr.f32.gmra.mrb[0].mxu0 %v564
        %v828 = vpop.f32.mrb[0].mxu0
        %v829 = vadd.f32 %v555, %v828
        %v830 = vpop.f32.mrb[0].mxu0
        %v831 = vadd.f32 %v555, %v830
        %832 = vdwg.mxu0
        %833 = vmatprep.subr.mxu0 %v523
        %834 = vmatpush1.msra.mxu0 %v522
        %835 = vmatprep.subr.mxu0 %v531
        %836 = vmatpush1.msra.mxu0 %v530
        %837 = vmatprep.subr.mxu0 %v524
        %838 = vmatpush1.msra.mxu0 %v523
        %839 = vmatprep.subr.mxu0 %v532
        %840 = vmatpush1.msra.mxu0 %v531
        %841 = vmatprep.subr.mxu0 0.0
        %842 = vmatpush1.msra.mxu0 %v524
        %843 = vmatprep.subr.mxu0 0.0
        %844 = vmatpush1.msra.mxu0 %v532
        %845 = vmatprep.subr.mxu0 0.0
        %846 = vmatpush1.msra.mxu0 0.0
        %847 = vmatprep.subr.mxu0 0.0
        %848 = vmatpush1.msra.mxu0 0.0
        %849 = vmatprep.subr.mxu0 0.0
        %850 = vmatpush1.msra.mxu0 0.0
        %851 = vmatprep.subr.mxu0 0.0
        %852 = vmatpush1.msra.mxu0 0.0
        %853 = vmatprep.subr.mxu0 0.0
        %854 = vmatpush1.msra.mxu0 0.0
        %855 = vmatprep.subr.mxu0 0.0
        %856 = vmatpush1.msra.mxu0 0.0
        %857 = vmatprep.subr.mxu0 0.0
        %858 = vmatpush1.msra.mxu0 0.0
        %859 = vmatprep.subr.mxu0 0.0
        %860 = vmatpush1.msra.mxu0 0.0
        %861 = vmatprep.subr.mxu0 0.0
        %862 = vmatpush1.msra.mxu0 0.0
        %863 = vmatprep.subr.mxu0 0.0
        %864 = vmatpush1.msra.mxu0 0.0
        %865 = vmatprep.subr.mxu0 0.0
        %866 = vmatpush1.msra.mxu0 0.0
        %867 = vmatprep.subr.mxu0 0.0
        %868 = vmatpush1.msra.mxu0 0.0
        %869 = vmatprep.subr.mxu0 0.0
        %870 = vmatpush1.msra.mxu0 0.0
        %871 = vmatprep.subr.mxu0 0.0
        %872 = vmatpush1.msra.mxu0 0.0
        %873 = vmatprep.subr.mxu0 0.0
        %874 = vmatpush1.msra.mxu0 0.0
        %875 = vmatprep.subr.mxu0 0.0
        %876 = vmatpush1.msra.mxu0 0.0
        %877 = vmatprep.subr.mxu0 0.0
        %878 = vmatpush1.msra.mxu0 0.0
        %879 = vmatprep.subr.mxu0 0.0
        %880 = vmatpush1.msra.mxu0 0.0
        %881 = vmatprep.subr.mxu0 0.0
        %882 = vmatpush1.msra.mxu0 0.0
        %883 = vmatprep.subr.mxu0 0.0
        %884 = vmatpush1.msra.mxu0 0.0
        %885 = vmatprep.subr.mxu0 0.0
        %886 = vmatpush1.msra.mxu0 0.0
        %887 = vmatprep.subr.mxu0 0.0
        %888 = vmatpush1.msra.mxu0 0.0
        %889 = vmatprep.subr.mxu0 0.0
        %890 = vmatpush1.msra.mxu0 0.0
        %891 = vmatprep.subr.mxu0 0.0
        %892 = vmatpush1.msra.mxu0 0.0
        %893 = vmatprep.subr.mxu0 0.0
        %894 = vmatpush1.msra.mxu0 0.0
        %895 = vmatprep.subr.mxu0 0.0
        %896 = vmatpush1.msra.mxu0 0.0
        %897 = vmatprep.mubr.f32.mxu0 0.0
        %898 = vmatmul.mubr.f32.gmra.mrb[0].mxu0 %v558
        %v899 = vpop.f32.mrb[0].mxu0
        %v900 = vadd.f32 %v540, %v899
        %v901 = vpop.f32.mrb[0].mxu0
        %v902 = vadd.f32 %v540, %v901
        %903 = vmatprep.mubr.f32.mxu0 0.0
        %904 = vmatmul.mubr.f32.gmra.mrb[0].mxu0 %v560
        %v905 = vpop.f32.mrb[0].mxu0
        %v906 = vadd.f32 %v545, %v905
        %v907 = vpop.f32.mrb[0].mxu0
        %v908 = vadd.f32 %v545, %v907
        %909 = vmatprep.mubr.f32.mxu0 0.0
        %910 = vmatmul.mubr.f32.gmra.mrb[0].mxu0 %v562
        %v911 = vpop.f32.mrb[0].mxu0
        %v912 = vadd.f32 %v550, %v911
        %v913 = vpop.f32.mrb[0].mxu0
        %v914 = vadd.f32 %v550, %v913
        %915 = vmatprep.mubr.f32.mxu0 0.0
        %916 = vmatmul.mubr.f32.gmra.mrb[0].mxu0 %v564
        %v917 = vpop.f32.mrb[0].mxu0
        %v918 = vadd.f32 %v555, %v917
        %v919 = vpop.f32.mrb[0].mxu0
        %v920 = vadd.f32 %v555, %v919
        %921 = vdwg.mxu0
        %vm922 = vcmp.gt.f32.partialorder %v633, 0.0
        %vm923 = vcmp.gt.f32.partialorder %v635, 0.0
        %vm924 = vcmp.gt.f32.partialorder %v722, 0.0
        %vm925 = vcmp.gt.f32.partialorder %v724, 0.0
        %vm926 = vcmp.gt.f32.partialorder %v811, 0.0
        %vm927 = vcmp.gt.f32.partialorder %v813, 0.0
        %vm928 = vcmp.gt.f32.partialorder %v900, 0.0
        %vm929 = vcmp.gt.f32.partialorder %v902, 0.0
        %vm930 = vcmp.gt.f32.partialorder %v639, 0.0
        %vm931 = vcmp.gt.f32.partialorder %v641, 0.0
        %vm932 = vcmp.gt.f32.partialorder %v728, 0.0
        %vm933 = vcmp.gt.f32.partialorder %v730, 0.0
        %vm934 = vcmp.gt.f32.partialorder %v817, 0.0
        %vm935 = vcmp.gt.f32.partialorder %v819, 0.0
        %vm936 = vcmp.gt.f32.partialorder %v906, 0.0
        %vm937 = vcmp.gt.f32.partialorder %v908, 0.0
        %vm938 = vcmp.gt.f32.partialorder %v645, 0.0
        %vm939 = vcmp.gt.f32.partialorder %v647, 0.0
        %vm940 = vcmp.gt.f32.partialorder %v734, 0.0
        %vm941 = vcmp.gt.f32.partialorder %v736, 0.0
        %vm942 = vcmp.gt.f32.partialorder %v823, 0.0
        %vm943 = vcmp.gt.f32.partialorder %v825, 0.0
        %vm944 = vcmp.gt.f32.partialorder %v912, 0.0
        %vm945 = vcmp.gt.f32.partialorder %v914, 0.0
        %vm946 = vcmp.gt.f32.partialorder %v651, 0.0
        %vm947 = vcmp.gt.f32.partialorder %v653, 0.0
        %vm948 = vcmp.gt.f32.partialorder %v740, 0.0
        %vm949 = vcmp.gt.f32.partialorder %v742, 0.0
        %vm950 = vcmp.gt.f32.partialorder %v829, 0.0
        %vm951 = vcmp.gt.f32.partialorder %v831, 0.0
        %vm952 = vcmp.gt.f32.partialorder %v918, 0.0
        %vm953 = vcmp.gt.f32.partialorder %v920, 0.0
        %v954 = vmul.f32 %v633, 0.1
        %v955 = vmul.f32 %v635, 0.1
        %v956 = vmul.f32 %v722, 0.1
        %v957 = vmul.f32 %v724, 0.1
        %v958 = vmul.f32 %v811, 0.1
        %v959 = vmul.f32 %v813, 0.1
        %v960 = vmul.f32 %v900, 0.1
        %v961 = vmul.f32 %v902, 0.1
        %v962 = vmul.f32 %v639, 0.1
        %v963 = vmul.f32 %v641, 0.1
        %v964 = vmul.f32 %v728, 0.1
        %v965 = vmul.f32 %v730, 0.1
        %v966 = vmul.f32 %v817, 0.1
        %v967 = vmul.f32 %v819, 0.1
        %v968 = vmul.f32 %v906, 0.1
        %v969 = vmul.f32 %v908, 0.1
        %v970 = vmul.f32 %v645, 0.1
        %v971 = vmul.f32 %v647, 0.1
        %v972 = vmul.f32 %v734, 0.1
        %v973 = vmul.f32 %v736, 0.1
        %v974 = vmul.f32 %v823, 0.1
        %v975 = vmul.f32 %v825, 0.1
        %v976 = vmul.f32 %v912, 0.1
        %v977 = vmul.f32 %v914, 0.1
        %v978 = vmul.f32 %v651, 0.1
        %v979 = vmul.f32 %v653, 0.1
        %v980 = vmul.f32 %v740, 0.1
        %v981 = vmul.f32 %v742, 0.1
        %v982 = vmul.f32 %v829, 0.1
        %v983 = vmul.f32 %v831, 0.1
        %v984 = vmul.f32 %v918, 0.1
        %v985 = vmul.f32 %v920, 0.1
        %v986 = vsel %vm922, %v633, %v954
        %v987 = vsel %vm923, %v635, %v955
        %v988 = vsel %vm924, %v722, %v956
        %v989 = vsel %vm925, %v724, %v957
        %v990 = vsel %vm926, %v811, %v958
        %v991 = vsel %vm927, %v813, %v959
        %v992 = vsel %vm928, %v900, %v960
        %v993 = vsel %vm929, %v902, %v961
        %v994 = vsel %vm930, %v639, %v962
        %v995 = vsel %vm931, %v641, %v963
        %v996 = vsel %vm932, %v728, %v964
        %v997 = vsel %vm933, %v730, %v965
        %v998 = vsel %vm934, %v817, %v966
        %v999 = vsel %vm935, %v819, %v967
        %v1000 = vsel %vm936, %v906, %v968
        %v1001 = vsel %vm937, %v908, %v969
        %v1002 = vsel %vm938, %v645, %v970
        %v1003 = vsel %vm939, %v647, %v971
        %v1004 = vsel %vm940, %v734, %v972
        %v1005 = vsel %vm941, %v736, %v973
        %v1006 = vsel %vm942, %v823, %v974
        %v1007 = vsel %vm943, %v825, %v975
        %v1008 = vsel %vm944, %v912, %v976
        %v1009 = vsel %vm945, %v914, %v977
        %v1010 = vsel %vm946, %v651, %v978
        %v1011 = vsel %vm947, %v653, %v979
        %v1012 = vsel %vm948, %v740, %v980
        %v1013 = vsel %vm949, %v742, %v981
        %v1014 = vsel %vm950, %v829, %v982
        %v1015 = vsel %vm951, %v831, %v983
        %v1016 = vsel %vm952, %v918, %v984
        %v1017 = vsel %vm953, %v920, %v985
        %v1018 = vld [vmem:[%s3] sm:$0xff]
        %v1019 = vld [vmem:[%s3 + $0x8] sm:$0xff]
        %v1020 = vld [vmem:[%s3 + $0x10] sm:$0xff]
        %v1021 = vld [vmem:[%s3 + $0x18] sm:$0xff]
        %v1022 = vld [vmem:[%s3 + $0x20] sm:$0xff]
        %v1023 = vld [vmem:[%s3 + $0x28] sm:$0xff]
        %v1024 = vld [vmem:[%s3 + $0x30] sm:$0xff]
        %v1025 = vld [vmem:[%s3 + $0x38] sm:$0xff]
        %1027 = vset.pattern.permute.xlu0 96
        %1028 = vperm.xlu0 %1027, %v1018
        %v1029 = vpop.permute.xlu0 %1028
        %1032 = vset.pattern.permute.xlu0 96
        %1033 = vperm.xlu0 %1032, %v1019
        %v1034 = vpop.permute.xlu0 %1033
        %1037 = vset.pattern.permute.xlu0 96
        %1038 = vperm.xlu0 %1037, %v1020
        %v1039 = vpop.permute.xlu0 %1038
        %1042 = vset.pattern.permute.xlu0 96
        %1043 = vperm.xlu0 %1042, %v1021
        %v1044 = vpop.permute.xlu0 %1043
        %1047 = vset.pattern.permute.xlu0 96
        %1048 = vperm.xlu0 %1047, %v1022
        %v1049 = vpop.permute.xlu0 %1048
        %1052 = vset.pattern.permute.xlu0 96
        %1053 = vperm.xlu0 %1052, %v1023
        %v1054 = vpop.permute.xlu0 %1053
        %1057 = vset.pattern.permute.xlu0 96
        %1058 = vperm.xlu0 %1057, %v1024
        %v1059 = vpop.permute.xlu0 %1058
        %1062 = vset.pattern.permute.xlu0 96
        %1063 = vperm.xlu0 %1062, %v1025
        %v1064 = vpop.permute.xlu0 %1063
        %vm1066 = vcmask 785408
        %v1067 = vsel %vm1066, %v1018, 0
        %v1069 = vsel %vm1066, %v1019, 0
        %v1071 = vsel %vm1066, %v1020, 0
        %v1073 = vsel %vm1066, %v1021, 0
        %v1075 = vsel %vm1066, %v1022, 0
        %v1077 = vsel %vm1066, %v1023, 0
        %v1079 = vsel %vm1066, %v1024, 0
        %v1081 = vsel %vm1066, %v1025, 0
        %1083 = vmatprep.subr.mxu0 %v986
        %1084 = vmatpush1.msra.mxu0 0.0
        %1085 = vmatprep.subr.mxu0 %v994
        %1086 = vmatpush1.msra.mxu0 0.0
        %1087 = vmatprep.subr.mxu0 %v1002
        %1088 = vmatpush1.msra.mxu0 0.0
        %1089 = vmatprep.subr.mxu0 %v1010
        %1090 = vmatpush1.msra.mxu0 0.0
        %1091 = vmatprep.subr.mxu0 %v987
        %1092 = vmatpush1.msra.mxu0 %v986
        %1093 = vmatprep.subr.mxu0 %v995
        %1094 = vmatpush1.msra.mxu0 %v994
        %1095 = vmatprep.subr.mxu0 %v1003
        %1096 = vmatpush1.msra.mxu0 %v1002
        %1097 = vmatprep.subr.mxu0 %v1011
        %1098 = vmatpush1.msra.mxu0 %v1010
        %1099 = vmatprep.subr.mxu0 %v988
        %1100 = vmatpush1.msra.mxu0 %v987
        %1101 = vmatprep.subr.mxu0 %v996
        %1102 = vmatpush1.msra.mxu0 %v995
        %1103 = vmatprep.subr.mxu0 %v1004
        %1104 = vmatpush1.msra.mxu0 %v1003
        %1105 = vmatprep.subr.mxu0 %v1012
        %1106 = vmatpush1.msra.mxu0 %v1011
        %1107 = vmatprep.subr.mxu0 0.0
        %1108 = vmatpush1.msra.mxu0 0.0
        %1109 = vmatprep.subr.mxu0 0.0
        %1110 = vmatpush1.msra.mxu0 0.0
        %1111 = vmatprep.subr.mxu0 0.0
        %1112 = vmatpush1.msra.mxu0 0.0
        %1113 = vmatprep.subr.mxu0 0.0
        %1114 = vmatpush1.msra.mxu0 0.0
        %1115 = vmatprep.subr.mxu0 0.0
        %1116 = vmatpush1.msra.mxu0 0.0
        %1117 = vmatprep.subr.mxu0 0.0
        %1118 = vmatpush1.msra.mxu0 0.0
        %1119 = vmatprep.subr.mxu0 0.0
        %1120 = vmatpush1.msra.mxu0 0.0
        %1121 = vmatprep.subr.mxu0 0.0
        %1122 = vmatpush1.msra.mxu0 0.0
        %1123 = vmatprep.subr.mxu0 0.0
        %1124 = vmatpush1.msra.mxu0 0.0
        %1125 = vmatprep.subr.mxu0 0.0
        %1126 = vmatpush1.msra.mxu0 0.0
        %1127 = vmatprep.subr.mxu0 0.0
        %1128 = vmatpush1.msra.mxu0 0.0
        %1129 = vmatprep.subr.mxu0 0.0
        %1130 = vmatpush1.msra.mxu0 0.0
        %1131 = vmatprep.subr.mxu0 0.0
        %1132 = vmatpush1.msra.mxu0 0.0
        %1133 = vmatprep.subr.mxu0 0.0
        %1134 = vmatpush1.msra.mxu0 0.0
        %1135 = vmatprep.subr.mxu0 0.0
        %1136 = vmatpush1.msra.mxu0 0.0
        %1137 = vmatprep.subr.mxu0 0.0
        %1138 = vmatpush1.msra.mxu0 0.0
        %1139 = vmatprep.subr.mxu0 0.0
        %1140 = vmatpush1.msra.mxu0 0.0
        %1141 = vmatprep.subr.mxu0 0.0
        %1142 = vmatpush1.msra.mxu0 0.0
        %1143 = vmatprep.subr.mxu0 0.0
        %1144 = vmatpush1.msra.mxu0 0.0
        %1145 = vmatprep.subr.mxu0 0.0
        %1146 = vmatpush1.msra.mxu0 0.0
        %1147 = vmatprep.mubr.f32.mxu0 0.0
        %1148 = vmatmul.mubr.f32.gmra.mrb[0].mxu0 %v1067
        %v1149 = vpop.f32.mrb[0].mxu0
        %v1150 = vadd.f32 %v1029, %v1149
        %v1151 = vpop.f32.mrb[0].mxu0
        %v1152 = vadd.f32 %v1029, %v1151
        %1153 = vmatprep.mubr.f32.mxu0 0.0
        %1154 = vmatmul.mubr.f32.gmra.mrb[0].mxu0 %v1069
        %v1155 = vpop.f32.mrb[0].mxu0
        %v1156 = vadd.f32 %v1034, %v1155
        %v1157 = vpop.f32.mrb[0].mxu0
        %v1158 = vadd.f32 %v1034, %v1157
        %1159 = vmatprep.mubr.f32.mxu0 0.0
        %1160 = vmatmul.mubr.f32.gmra.mrb[0].mxu0 %v1071
        %v1161 = vpop.f32.mrb[0].mxu0
        %v1162 = vadd.f32 %v1039, %v1161
        %v1163 = vpop.f32.mrb[0].mxu0
        %v1164 = vadd.f32 %v1039, %v1163
        %1165 = vmatprep.mubr.f32.mxu0 0.0
        %1166 = vmatmul.mubr.f32.gmra.mrb[0].mxu0 %v1073
        %v1167 = vpop.f32.mrb[0].mxu0
        %v1168 = vadd.f32 %v1044, %v1167
        %v1169 = vpop.f32.mrb[0].mxu0
        %v1170 = vadd.f32 %v1044, %v1169
        %1171 = vmatprep.mubr.f32.mxu0 0.0
        %1172 = vmatmul.mubr.f32.gmra.mrb[0].mxu0 %v1075
        %v1173 = vpop.f32.mrb[0].mxu0
        %v1174 = vadd.f32 %v1049, %v1173
        %v1175 = vpop.f32.mrb[0].mxu0
        %v1176 = vadd.f32 %v1049, %v1175
        %1177 = vmatprep.mubr.f32.mxu0 0.0
        %1178 = vmatmul.mubr.f32.gmra.mrb[0].mxu0 %v1077
        %v1179 = vpop.f32.mrb[0].mxu0
        %v1180 = vadd.f32 %v1054, %v1179
        %v1181 = vpop.f32.mrb[0].mxu0
        %v1182 = vadd.f32 %v1054, %v1181
        %1183 = vmatprep.mubr.f32.mxu0 0.0
        %1184 = vmatmul.mubr.f32.gmra.mrb[0].mxu0 %v1079
        %v1185 = vpop.f32.mrb[0].mxu0
        %v1186 = vadd.f32 %v1059, %v1185
        %v1187 = vpop.f32.mrb[0].mxu0
        %v1188 = vadd.f32 %v1059, %v1187
        %1189 = vmatprep.mubr.f32.mxu0 0.0
        %1190 = vmatmul.mubr.f32.gmra.mrb[0].mxu0 %v1081
        %v1191 = vpop.f32.mrb[0].mxu0
        %v1192 = vadd.f32 %v1064, %v1191
        %v1193 = vpop.f32.mrb[0].mxu0
        %v1194 = vadd.f32 %v1064, %v1193
        %1195 = vdwg.mxu0
        %1196 = vmatprep.subr.mxu0 %v988
        %1197 = vmatpush1.msra.mxu0 %v987
        %1198 = vmatprep.subr.mxu0 %v996
        %1199 = vmatpush1.msra.mxu0 %v995
        %1200 = vmatprep.subr.mxu0 %v1004
        %1201 = vmatpush1.msra.mxu0 %v1003
        %1202 = vmatprep.subr.mxu0 %v1012
        %1203 = vmatpush1.msra.mxu0 %v1011
        %1204 = vmatprep.subr.mxu0 %v989
        %1205 = vmatpush1.msra.mxu0 %v988
        %1206 = vmatprep.subr.mxu0 %v997
        %1207 = vmatpush1.msra.mxu0 %v996
        %1208 = vmatprep.subr.mxu0 %v1005
        %1209 = vmatpush1.msra.mxu0 %v1004
        %1210 = vmatprep.subr.mxu0 %v1013
        %1211 = vmatpush1.msra.mxu0 %v1012
        %1212 = vmatprep.subr.mxu0 %v990
        %1213 = vmatpush1.msra.mxu0 %v989
        %1214 = vmatprep.subr.mxu0 %v998
        %1215 = vmatpush1.msra.mxu0 %v997
        %1216 = vmatprep.subr.mxu0 %v1006
        %1217 = vmatpush1.msra.mxu0 %v1005
        %1218 = vmatprep.subr.mxu0 %v1014
        %1219 = vmatpush1.msra.mxu0 %v1013
        %1220 = vmatprep.subr.mxu0 0.0
        %1221 = vmatpush1.msra.mxu0 0.0
        %1222 = vmatprep.subr.mxu0 0.0
        %1223 = vmatpush1.msra.mxu0 0.0
        %1224 = vmatprep.subr.mxu0 0.0
        %1225 = vmatpush1.msra.mxu0 0.0
        %1226 = vmatprep.subr.mxu0 0.0
        %1227 = vmatpush1.msra.mxu0 0.0
        %1228 = vmatprep.subr.mxu0 0.0
        %1229 = vmatpush1.msra.mxu0 0.0
        %1230 = vmatprep.subr.mxu0 0.0
        %1231 = vmatpush1.msra.mxu0 0.0
        %1232 = vmatprep.subr.mxu0 0.0
        %1233 = vmatpush1.msra.mxu0 0.0
        %1234 = vmatprep.subr.mxu0 0.0
        %1235 = vmatpush1.msra.mxu0 0.0
        %1236 = vmatprep.subr.mxu0 0.0
        %1237 = vmatpush1.msra.mxu0 0.0
        %1238 = vmatprep.subr.mxu0 0.0
        %1239 = vmatpush1.msra.mxu0 0.0
        %1240 = vmatprep.subr.mxu0 0.0
        %1241 = vmatpush1.msra.mxu0 0.0
        %1242 = vmatprep.subr.mxu0 0.0
        %1243 = vmatpush1.msra.mxu0 0.0
        %1244 = vmatprep.subr.mxu0 0.0
        %1245 = vmatpush1.msra.mxu0 0.0
        %1246 = vmatprep.subr.mxu0 0.0
        %1247 = vmatpush1.msra.mxu0 0.0
        %1248 = vmatprep.subr.mxu0 0.0
        %1249 = vmatpush1.msra.mxu0 0.0
        %1250 = vmatprep.subr.mxu0 0.0
        %1251 = vmatpush1.msra.mxu0 0.0
        %1252 = vmatprep.subr.mxu0 0.0
        %1253 = vmatpush1.msra.mxu0 0.0
        %1254 = vmatprep.subr.mxu0 0.0
        %1255 = vmatpush1.msra.mxu0 0.0
        %1256 = vmatprep.subr.mxu0 0.0
        %1257 = vmatpush1.msra.mxu0 0.0
        %1258 = vmatprep.subr.mxu0 0.0
        %1259 = vmatpush1.msra.mxu0 0.0
        %1260 = vmatprep.mubr.f32.mxu0 0.0
        %1261 = vmatmul.mubr.f32.gmra.mrb[0].mxu0 %v1067
        %v1262 = vpop.f32.mrb[0].mxu0
        %v1263 = vadd.f32 %v1029, %v1262
        %v1264 = vpop.f32.mrb[0].mxu0
        %v1265 = vadd.f32 %v1029, %v1264
        %1266 = vmatprep.mubr.f32.mxu0 0.0
        %1267 = vmatmul.mubr.f32.gmra.mrb[0].mxu0 %v1069
        %v1268 = vpop.f32.mrb[0].mxu0
        %v1269 = vadd.f32 %v1034, %v1268
        %v1270 = vpop.f32.mrb[0].mxu0
        %v1271 = vadd.f32 %v1034, %v1270
        %1272 = vmatprep.mubr.f32.mxu0 0.0
        %1273 = vmatmul.mubr.f32.gmra.mrb[0].mxu0 %v1071
        %v1274 = vpop.f32.mrb[0].mxu0
        %v1275 = vadd.f32 %v1039, %v1274
        %v1276 = vpop.f32.mrb[0].mxu0
        %v1277 = vadd.f32 %v1039, %v1276
        %1278 = vmatprep.mubr.f32.mxu0 0.0
        %1279 = vmatmul.mubr.f32.gmra.mrb[0].mxu0 %v1073
        %v1280 = vpop.f32.mrb[0].mxu0
        %v1281 = vadd.f32 %v1044, %v1280
        %v1282 = vpop.f32.mrb[0].mxu0
        %v1283 = vadd.f32 %v1044, %v1282
        %1284 = vmatprep.mubr.f32.mxu0 0.0
        %1285 = vmatmul.mubr.f32.gmra.mrb[0].mxu0 %v1075
        %v1286 = vpop.f32.mrb[0].mxu0
        %v1287 = vadd.f32 %v1049, %v1286
        %v1288 = vpop.f32.mrb[0].mxu0
        %v1289 = vadd.f32 %v1049, %v1288
        %1290 = vmatprep.mubr.f32.mxu0 0.0
        %1291 = vmatmul.mubr.f32.gmra.mrb[0].mxu0 %v1077
        %v1292 = vpop.f32.mrb[0].mxu0
        %v1293 = vadd.f32 %v1054, %v1292
        %v1294 = vpop.f32.mrb[0].mxu0
        %v1295 = vadd.f32 %v1054, %v1294
        %1296 = vmatprep.mubr.f32.mxu0 0.0
        %1297 = vmatmul.mubr.f32.gmra.mrb[0].mxu0 %v1079
        %v1298 = vpop.f32.mrb[0].mxu0
        %v1299 = vadd.f32 %v1059, %v1298
        %v1300 = vpop.f32.mrb[0].mxu0
        %v1301 = vadd.f32 %v1059, %v1300
        %1302 = vmatprep.mubr.f32.mxu0 0.0
        %1303 = vmatmul.mubr.f32.gmra.mrb[0].mxu0 %v1081
        %v1304 = vpop.f32.mrb[0].mxu0
        %v1305 = vadd.f32 %v1064, %v1304
        %v1306 = vpop.f32.mrb[0].mxu0
        %v1307 = vadd.f32 %v1064, %v1306
        %1308 = vdwg.mxu0
        %1309 = vmatprep.subr.mxu0 %v990
        %1310 = vmatpush1.msra.mxu0 %v989
        %1311 = vmatprep.subr.mxu0 %v998
        %1312 = vmatpush1.msra.mxu0 %v997
        %1313 = vmatprep.subr.mxu0 %v1006
        %1314 = vmatpush1.msra.mxu0 %v1005
        %1315 = vmatprep.subr.mxu0 %v1014
        %1316 = vmatpush1.msra.mxu0 %v1013
        %1317 = vmatprep.subr.mxu0 %v991
        %1318 = vmatpush1.msra.mxu0 %v990
        %1319 = vmatprep.subr.mxu0 %v999
        %1320 = vmatpush1.msra.mxu0 %v998
        %1321 = vmatprep.subr.mxu0 %v1007
        %1322 = vmatpush1.msra.mxu0 %v1006
        %1323 = vmatprep.subr.mxu0 %v1015
        %1324 = vmatpush1.msra.mxu0 %v1014
        %1325 = vmatprep.subr.mxu0 %v992
        %1326 = vmatpush1.msra.mxu0 %v991
        %1327 = vmatprep.subr.mxu0 %v1000
        %1328 = vmatpush1.msra.mxu0 %v999
        %1329 = vmatprep.subr.mxu0 %v1008
        %1330 = vmatpush1.msra.mxu0 %v1007
        %1331 = vmatprep.subr.mxu0 %v1016
        %1332 = vmatpush1.msra.mxu0 %v1015
        %1333 = vmatprep.subr.mxu0 0.0
        %1334 = vmatpush1.msra.mxu0 0.0
        %1335 = vmatprep.subr.mxu0 0.0
        %1336 = vmatpush1.msra.mxu0 0.0
        %1337 = vmatprep.subr.mxu0 0.0
        %1338 = vmatpush1.msra.mxu0 0.0
        %1339 = vmatprep.subr.mxu0 0.0
        %1340 = vmatpush1.msra.mxu0 0.0
        %1341 = vmatprep.subr.mxu0 0.0
        %1342 = vmatpush1.msra.mxu0 0.0
        %1343 = vmatprep.subr.mxu0 0.0
        %1344 = vmatpush1.msra.mxu0 0.0
        %1345 = vmatprep.subr.mxu0 0.0
        %1346 = vmatpush1.msra.mxu0 0.0
        %1347 = vmatprep.subr.mxu0 0.0
        %1348 = vmatpush1.msra.mxu0 0.0
        %1349 = vmatprep.subr.mxu0 0.0
        %1350 = vmatpush1.msra.mxu0 0.0
        %1351 = vmatprep.subr.mxu0 0.0
        %1352 = vmatpush1.msra.mxu0 0.0
        %1353 = vmatprep.subr.mxu0 0.0
        %1354 = vmatpush1.msra.mxu0 0.0
        %1355 = vmatprep.subr.mxu0 0.0
        %1356 = vmatpush1.msra.mxu0 0.0
        %1357 = vmatprep.subr.mxu0 0.0
        %1358 = vmatpush1.msra.mxu0 0.0
        %1359 = vmatprep.subr.mxu0 0.0
        %1360 = vmatpush1.msra.mxu0 0.0
        %1361 = vmatprep.subr.mxu0 0.0
        %1362 = vmatpush1.msra.mxu0 0.0
        %1363 = vmatprep.subr.mxu0 0.0
        %1364 = vmatpush1.msra.mxu0 0.0
        %1365 = vmatprep.subr.mxu0 0.0
        %1366 = vmatpush1.msra.mxu0 0.0
        %1367 = vmatprep.subr.mxu0 0.0
        %1368 = vmatpush1.msra.mxu0 0.0
        %1369 = vmatprep.subr.mxu0 0.0
        %1370 = vmatpush1.msra.mxu0 0.0
        %1371 = vmatprep.subr.mxu0 0.0
        %1372 = vmatpush1.msra.mxu0 0.0
        %1373 = vmatprep.mubr.f32.mxu0 0.0
        %1374 = vmatmul.mubr.f32.gmra.mrb[0].mxu0 %v1067
        %v1375 = vpop.f32.mrb[0].mxu0
        %v1376 = vadd.f32 %v1029, %v1375
        %v1377 = vpop.f32.mrb[0].mxu0
        %v1378 = vadd.f32 %v1029, %v1377
        %1379 = vmatprep.mubr.f32.mxu0 0.0
        %1380 = vmatmul.mubr.f32.gmra.mrb[0].mxu0 %v1069
        %v1381 = vpop.f32.mrb[0].mxu0
        %v1382 = vadd.f32 %v1034, %v1381
        %v1383 = vpop.f32.mrb[0].mxu0
        %v1384 = vadd.f32 %v1034, %v1383
        %1385 = vmatprep.mubr.f32.mxu0 0.0
        %1386 = vmatmul.mubr.f32.gmra.mrb[0].mxu0 %v1071
        %v1387 = vpop.f32.mrb[0].mxu0
        %v1388 = vadd.f32 %v1039, %v1387
        %v1389 = vpop.f32.mrb[0].mxu0
        %v1390 = vadd.f32 %v1039, %v1389
        %1391 = vmatprep.mubr.f32.mxu0 0.0
        %1392 = vmatmul.mubr.f32.gmra.mrb[0].mxu0 %v1073
        %v1393 = vpop.f32.mrb[0].mxu0
        %v1394 = vadd.f32 %v1044, %v1393
        %v1395 = vpop.f32.mrb[0].mxu0
        %v1396 = vadd.f32 %v1044, %v1395
        %1397 = vmatprep.mubr.f32.mxu0 0.0
        %1398 = vmatmul.mubr.f32.gmra.mrb[0].mxu0 %v1075
        %v1399 = vpop.f32.mrb[0].mxu0
        %v1400 = vadd.f32 %v1049, %v1399
        %v1401 = vpop.f32.mrb[0].mxu0
        %v1402 = vadd.f32 %v1049, %v1401
        %1403 = vmatprep.mubr.f32.mxu0 0.0
        %1404 = vmatmul.mubr.f32.gmra.mrb[0].mxu0 %v1077
        %v1405 = vpop.f32.mrb[0].mxu0
        %v1406 = vadd.f32 %v1054, %v1405
        %v1407 = vpop.f32.mrb[0].mxu0
        %v1408 = vadd.f32 %v1054, %v1407
        %1409 = vmatprep.mubr.f32.mxu0 0.0
        %1410 = vmatmul.mubr.f32.gmra.mrb[0].mxu0 %v1079
        %v1411 = vpop.f32.mrb[0].mxu0
        %v1412 = vadd.f32 %v1059, %v1411
        %v1413 = vpop.f32.mrb[0].mxu0
        %v1414 = vadd.f32 %v1059, %v1413
        %1415 = vmatprep.mubr.f32.mxu0 0.0
        %1416 = vmatmul.mubr.f32.gmra.mrb[0].mxu0 %v1081
        %v1417 = vpop.f32.mrb[0].mxu0
        %v1418 = vadd.f32 %v1064, %v1417
        %v1419 = vpop.f32.mrb[0].mxu0
        %v1420 = vadd.f32 %v1064, %v1419
        %1421 = vdwg.mxu0
        %1422 = vmatprep.subr.mxu0 %v992
        %1423 = vmatpush1.msra.mxu0 %v991
        %1424 = vmatprep.subr.mxu0 %v1000
        %1425 = vmatpush1.msra.mxu0 %v999
        %1426 = vmatprep.subr.mxu0 %v1008
        %1427 = vmatpush1.msra.mxu0 %v1007
        %1428 = vmatprep.subr.mxu0 %v1016
        %1429 = vmatpush1.msra.mxu0 %v1015
        %1430 = vmatprep.subr.mxu0 %v993
        %1431 = vmatpush1.msra.mxu0 %v992
        %1432 = vmatprep.subr.mxu0 %v1001
        %1433 = vmatpush1.msra.mxu0 %v1000
        %1434 = vmatprep.subr.mxu0 %v1009
        %1435 = vmatpush1.msra.mxu0 %v1008
        %1436 = vmatprep.subr.mxu0 %v1017
        %1437 = vmatpush1.msra.mxu0 %v1016
        %1438 = vmatprep.subr.mxu0 0.0
        %1439 = vmatpush1.msra.mxu0 %v993
        %1440 = vmatprep.subr.mxu0 0.0
        %1441 = vmatpush1.msra.mxu0 %v1001
        %1442 = vmatprep.subr.mxu0 0.0
        %1443 = vmatpush1.msra.mxu0 %v1009
        %1444 = vmatprep.subr.mxu0 0.0
        %1445 = vmatpush1.msra.mxu0 %v1017
        %1446 = vmatprep.subr.mxu0 0.0
        %1447 = vmatpush1.msra.mxu0 0.0
        %1448 = vmatprep.subr.mxu0 0.0
        %1449 = vmatpush1.msra.mxu0 0.0
        %1450 = vmatprep.subr.mxu0 0.0
        %1451 = vmatpush1.msra.mxu0 0.0
        %1452 = vmatprep.subr.mxu0 0.0
        %1453 = vmatpush1.msra.mxu0 0.0
        %1454 = vmatprep.subr.mxu0 0.0
        %1455 = vmatpush1.msra.mxu0 0.0
        %1456 = vmatprep.subr.mxu0 0.0
        %1457 = vmatpush1.msra.mxu0 0.0
        %1458 = vmatprep.subr.mxu0 0.0
        %1459 = vmatpush1.msra.mxu0 0.0
        %1460 = vmatprep.subr.mxu0 0.0
        %1461 = vmatpush1.msra.mxu0 0.0
        %1462 = vmatprep.subr.mxu0 0.0
        %1463 = vmatpush1.msra.mxu0 0.0
        %1464 = vmatprep.subr.mxu0 0.0
        %1465 = vmatpush1.msra.mxu0 0.0
        %1466 = vmatprep.subr.mxu0 0.0
        %1467 = vmatpush1.msra.mxu0 0.0
        %1468 = vmatprep.subr.mxu0 0.0
        %1469 = vmatpush1.msra.mxu0 0.0
        %1470 = vmatprep.subr.mxu0 0.0
        %1471 = vmatpush1.msra.mxu0 0.0
        %1472 = vmatprep.subr.mxu0 0.0
        %1473 = vmatpush1.msra.mxu0 0.0
        %1474 = vmatprep.subr.mxu0 0.0
        %1475 = vmatpush1.msra.mxu0 0.0
        %1476 = vmatprep.subr.mxu0 0.0
        %1477 = vmatpush1.msra.mxu0 0.0
        %1478 = vmatprep.subr.mxu0 0.0
        %1479 = vmatpush1.msra.mxu0 0.0
        %1480 = vmatprep.subr.mxu0 0.0
        %1481 = vmatpush1.msra.mxu0 0.0
        %1482 = vmatprep.subr.mxu0 0.0
        %1483 = vmatpush1.msra.mxu0 0.0
        %1484 = vmatprep.subr.mxu0 0.0
        %1485 = vmatpush1.msra.mxu0 0.0
        %1486 = vmatprep.mubr.f32.mxu0 0.0
        %1487 = vmatmul.mubr.f32.gmra.mrb[0].mxu0 %v1067
        %v1488 = vpop.f32.mrb[0].mxu0
        %v1489 = vadd.f32 %v1029, %v1488
        %v1490 = vpop.f32.mrb[0].mxu0
        %v1491 = vadd.f32 %v1029, %v1490
        %1492 = vmatprep.mubr.f32.mxu0 0.0
        %1493 = vmatmul.mubr.f32.gmra.mrb[0].mxu0 %v1069
        %v1494 = vpop.f32.mrb[0].mxu0
        %v1495 = vadd.f32 %v1034, %v1494
        %v1496 = vpop.f32.mrb[0].mxu0
        %v1497 = vadd.f32 %v1034, %v1496
        %1498 = vmatprep.mubr.f32.mxu0 0.0
        %1499 = vmatmul.mubr.f32.gmra.mrb[0].mxu0 %v1071
        %v1500 = vpop.f32.mrb[0].mxu0
        %v1501 = vadd.f32 %v1039, %v1500
        %v1502 = vpop.f32.mrb[0].mxu0
        %v1503 = vadd.f32 %v1039, %v1502
        %1504 = vmatprep.mubr.f32.mxu0 0.0
        %1505 = vmatmul.mubr.f32.gmra.mrb[0].mxu0 %v1073
        %v1506 = vpop.f32.mrb[0].mxu0
        %v1507 = vadd.f32 %v1044, %v1506
        %v1508 = vpop.f32.mrb[0].mxu0
        %v1509 = vadd.f32 %v1044, %v1508
        %1510 = vmatprep.mubr.f32.mxu0 0.0
        %1511 = vmatmul.mubr.f32.gmra.mrb[0].mxu0 %v1075
        %v1512 = vpop.f32.mrb[0].mxu0
        %v1513 = vadd.f32 %v1049, %v1512
        %v1514 = vpop.f32.mrb[0].mxu0
        %v1515 = vadd.f32 %v1049, %v1514
        %1516 = vmatprep.mubr.f32.mxu0 0.0
        %1517 = vmatmul.mubr.f32.gmra.mrb[0].mxu0 %v1077
        %v1518 = vpop.f32.mrb[0].mxu0
        %v1519 = vadd.f32 %v1054, %v1518
        %v1520 = vpop.f32.mrb[0].mxu0
        %v1521 = vadd.f32 %v1054, %v1520
        %1522 = vmatprep.mubr.f32.mxu0 0.0
        %1523 = vmatmul.mubr.f32.gmra.mrb[0].mxu0 %v1079
        %v1524 = vpop.f32.mrb[0].mxu0
        %v1525 = vadd.f32 %v1059, %v1524
        %v1526 = vpop.f32.mrb[0].mxu0
        %v1527 = vadd.f32 %v1059, %v1526
        %1528 = vmatprep.mubr.f32.mxu0 0.0
        %1529 = vmatmul.mubr.f32.gmra.mrb[0].mxu0 %v1081
        %v1530 = vpop.f32.mrb[0].mxu0
        %v1531 = vadd.f32 %v1064, %v1530
        %v1532 = vpop.f32.mrb[0].mxu0
        %v1533 = vadd.f32 %v1064, %v1532
        %1534 = vdwg.mxu0
        %vm1535 = vcmp.gt.f32.partialorder %v1150, 0.0
        %vm1536 = vcmp.gt.f32.partialorder %v1152, 0.0
        %vm1537 = vcmp.gt.f32.partialorder %v1263, 0.0
        %vm1538 = vcmp.gt.f32.partialorder %v1265, 0.0
        %vm1539 = vcmp.gt.f32.partialorder %v1376, 0.0
        %vm1540 = vcmp.gt.f32.partialorder %v1378, 0.0
        %vm1541 = vcmp.gt.f32.partialorder %v1489, 0.0
        %vm1542 = vcmp.gt.f32.partialorder %v1491, 0.0
        %vm1543 = vcmp.gt.f32.partialorder %v1156, 0.0
        %vm1544 = vcmp.gt.f32.partialorder %v1158, 0.0
        %vm1545 = vcmp.gt.f32.partialorder %v1269, 0.0
        %vm1546 = vcmp.gt.f32.partialorder %v1271, 0.0
        %vm1547 = vcmp.gt.f32.partialorder %v1382, 0.0
        %vm1548 = vcmp.gt.f32.partialorder %v1384, 0.0
        %vm1549 = vcmp.gt.f32.partialorder %v1495, 0.0
        %vm1550 = vcmp.gt.f32.partialorder %v1497, 0.0
        %vm1551 = vcmp.gt.f32.partialorder %v1162, 0.0
        %vm1552 = vcmp.gt.f32.partialorder %v1164, 0.0
        %vm1553 = vcmp.gt.f32.partialorder %v1275, 0.0
        %vm1554 = vcmp.gt.f32.partialorder %v1277, 0.0
        %vm1555 = vcmp.gt.f32.partialorder %v1388, 0.0
        %vm1556 = vcmp.gt.f32.partialorder %v1390, 0.0
        %vm1557 = vcmp.gt.f32.partialorder %v1501, 0.0
        %vm1558 = vcmp.gt.f32.partialorder %v1503, 0.0
        %vm1559 = vcmp.gt.f32.partialorder %v1168, 0.0
        %vm1560 = vcmp.gt.f32.partialorder %v1170, 0.0
        %vm1561 = vcmp.gt.f32.partialorder %v1281, 0.0
        %vm1562 = vcmp.gt.f32.partialorder %v1283, 0.0
        %vm1563 = vcmp.gt.f32.partialorder %v1394, 0.0
        %vm1564 = vcmp.gt.f32.partialorder %v1396, 0.0
        %vm1565 = vcmp.gt.f32.partialorder %v1507, 0.0
        %vm1566 = vcmp.gt.f32.partialorder %v1509, 0.0
        %vm1567 = vcmp.gt.f32.partialorder %v1174, 0.0
        %vm1568 = vcmp.gt.f32.partialorder %v1176, 0.0
        %vm1569 = vcmp.gt.f32.partialorder %v1287, 0.0
        %vm1570 = vcmp.gt.f32.partialorder %v1289, 0.0
        %vm1571 = vcmp.gt.f32.partialorder %v1400, 0.0
        %vm1572 = vcmp.gt.f32.partialorder %v1402, 0.0
        %vm1573 = vcmp.gt.f32.partialorder %v1513, 0.0
        %vm1574 = vcmp.gt.f32.partialorder %v1515, 0.0
        %vm1575 = vcmp.gt.f32.partialorder %v1180, 0.0
        %vm1576 = vcmp.gt.f32.partialorder %v1182, 0.0
        %vm1577 = vcmp.gt.f32.partialorder %v1293, 0.0
        %vm1578 = vcmp.gt.f32.partialorder %v1295, 0.0
        %vm1579 = vcmp.gt.f32.partialorder %v1406, 0.0
        %vm1580 = vcmp.gt.f32.partialorder %v1408, 0.0
        %vm1581 = vcmp.gt.f32.partialorder %v1519, 0.0
        %vm1582 = vcmp.gt.f32.partialorder %v1521, 0.0
        %vm1583 = vcmp.gt.f32.partialorder %v1186, 0.0
        %vm1584 = vcmp.gt.f32.partialorder %v1188, 0.0
        %vm1585 = vcmp.gt.f32.partialorder %v1299, 0.0
        %vm1586 = vcmp.gt.f32.partialorder %v1301, 0.0
        %vm1587 = vcmp.gt.f32.partialorder %v1412, 0.0
        %vm1588 = vcmp.gt.f32.partialorder %v1414, 0.0
        %vm1589 = vcmp.gt.f32.partialorder %v1525, 0.0
        %vm1590 = vcmp.gt.f32.partialorder %v1527, 0.0
        %vm1591 = vcmp.gt.f32.partialorder %v1192, 0.0
        %vm1592 = vcmp.gt.f32.partialorder %v1194, 0.0
        %vm1593 = vcmp.gt.f32.partialorder %v1305, 0.0
        %vm1594 = vcmp.gt.f32.partialorder %v1307, 0.0
        %vm1595 = vcmp.gt.f32.partialorder %v1418, 0.0
        %vm1596 = vcmp.gt.f32.partialorder %v1420, 0.0
        %vm1597 = vcmp.gt.f32.partialorder %v1531, 0.0
        %vm1598 = vcmp.gt.f32.partialorder %v1533, 0.0
        %v1599 = vmul.f32 %v1150, 0.1
        %v1600 = vmul.f32 %v1152, 0.1
        %v1601 = vmul.f32 %v1263, 0.1
        %v1602 = vmul.f32 %v1265, 0.1
        %v1603 = vmul.f32 %v1376, 0.1
        %v1604 = vmul.f32 %v1378, 0.1
        %v1605 = vmul.f32 %v1489, 0.1
        %v1606 = vmul.f32 %v1491, 0.1
        %v1607 = vmul.f32 %v1156, 0.1
        %v1608 = vmul.f32 %v1158, 0.1
        %v1609 = vmul.f32 %v1269, 0.1
        %v1610 = vmul.f32 %v1271, 0.1
        %v1611 = vmul.f32 %v1382, 0.1
        %v1612 = vmul.f32 %v1384, 0.1
        %v1613 = vmul.f32 %v1495, 0.1
        %v1614 = vmul.f32 %v1497, 0.1
        %v1615 = vmul.f32 %v1162, 0.1
        %v1616 = vmul.f32 %v1164, 0.1
        %v1617 = vmul.f32 %v1275, 0.1
        %v1618 = vmul.f32 %v1277, 0.1
        %v1619 = vmul.f32 %v1388, 0.1
        %v1620 = vmul.f32 %v1390, 0.1
        %v1621 = vmul.f32 %v1501, 0.1
        %v1622 = vmul.f32 %v1503, 0.1
        %v1623 = vmul.f32 %v1168, 0.1
        %v1624 = vmul.f32 %v1170, 0.1
        %v1625 = vmul.f32 %v1281, 0.1
        %v1626 = vmul.f32 %v1283, 0.1
        %v1627 = vmul.f32 %v1394, 0.1
        %v1628 = vmul.f32 %v1396, 0.1
        %v1629 = vmul.f32 %v1507, 0.1
        %v1630 = vmul.f32 %v1509, 0.1
        %v1631 = vmul.f32 %v1174, 0.1
        %v1632 = vmul.f32 %v1176, 0.1
        %v1633 = vmul.f32 %v1287, 0.1
        %v1634 = vmul.f32 %v1289, 0.1
        %v1635 = vmul.f32 %v1400, 0.1
        %v1636 = vmul.f32 %v1402, 0.1
        %v1637 = vmul.f32 %v1513, 0.1
        %v1638 = vmul.f32 %v1515, 0.1
        %v1639 = vmul.f32 %v1180, 0.1
        %v1640 = vmul.f32 %v1182, 0.1
        %v1641 = vmul.f32 %v1293, 0.1
        %v1642 = vmul.f32 %v1295, 0.1
        %v1643 = vmul.f32 %v1406, 0.1
        %v1644 = vmul.f32 %v1408, 0.1
        %v1645 = vmul.f32 %v1519, 0.1
        %v1646 = vmul.f32 %v1521, 0.1
        %v1647 = vmul.f32 %v1186, 0.1
        %v1648 = vmul.f32 %v1188, 0.1
        %v1649 = vmul.f32 %v1299, 0.1
        %v1650 = vmul.f32 %v1301, 0.1
        %v1651 = vmul.f32 %v1412, 0.1
        %v1652 = vmul.f32 %v1414, 0.1
        %v1653 = vmul.f32 %v1525, 0.1
        %v1654 = vmul.f32 %v1527, 0.1
        %v1655 = vmul.f32 %v1192, 0.1
        %v1656 = vmul.f32 %v1194, 0.1
        %v1657 = vmul.f32 %v1305, 0.1
        %v1658 = vmul.f32 %v1307, 0.1
        %v1659 = vmul.f32 %v1418, 0.1
        %v1660 = vmul.f32 %v1420, 0.1
        %v1661 = vmul.f32 %v1531, 0.1
        %v1662 = vmul.f32 %v1533, 0.1
        %v1663 = vsel %vm1535, %v1150, %v1599
        %v1664 = vsel %vm1536, %v1152, %v1600
        %v1665 = vsel %vm1537, %v1263, %v1601
        %v1666 = vsel %vm1538, %v1265, %v1602
        %v1667 = vsel %vm1539, %v1376, %v1603
        %v1668 = vsel %vm1540, %v1378, %v1604
        %v1669 = vsel %vm1541, %v1489, %v1605
        %v1670 = vsel %vm1542, %v1491, %v1606
        %v1671 = vsel %vm1543, %v1156, %v1607
        %v1672 = vsel %vm1544, %v1158, %v1608
        %v1673 = vsel %vm1545, %v1269, %v1609
        %v1674 = vsel %vm1546, %v1271, %v1610
        %v1675 = vsel %vm1547, %v1382, %v1611
        %v1676 = vsel %vm1548, %v1384, %v1612
        %v1677 = vsel %vm1549, %v1495, %v1613
        %v1678 = vsel %vm1550, %v1497, %v1614
        %v1679 = vsel %vm1551, %v1162, %v1615
        %v1680 = vsel %vm1552, %v1164, %v1616
        %v1681 = vsel %vm1553, %v1275, %v1617
        %v1682 = vsel %vm1554, %v1277, %v1618
        %v1683 = vsel %vm1555, %v1388, %v1619
        %v1684 = vsel %vm1556, %v1390, %v1620
        %v1685 = vsel %vm1557, %v1501, %v1621
        %v1686 = vsel %vm1558, %v1503, %v1622
        %v1687 = vsel %vm1559, %v1168, %v1623
        %v1688 = vsel %vm1560, %v1170, %v1624
        %v1689 = vsel %vm1561, %v1281, %v1625
        %v1690 = vsel %vm1562, %v1283, %v1626
        %v1691 = vsel %vm1563, %v1394, %v1627
        %v1692 = vsel %vm1564, %v1396, %v1628
        %v1693 = vsel %vm1565, %v1507, %v1629
        %v1694 = vsel %vm1566, %v1509, %v1630
        %v1695 = vsel %vm1567, %v1174, %v1631
        %v1696 = vsel %vm1568, %v1176, %v1632
        %v1697 = vsel %vm1569, %v1287, %v1633
        %v1698 = vsel %vm1570, %v1289, %v1634
        %v1699 = vsel %vm1571, %v1400, %v1635
        %v1700 = vsel %vm1572, %v1402, %v1636
        %v1701 = vsel %vm1573, %v1513, %v1637
        %v1702 = vsel %vm1574, %v1515, %v1638
        %v1703 = vsel %vm1575, %v1180, %v1639
        %v1704 = vsel %vm1576, %v1182, %v1640
        %v1705 = vsel %vm1577, %v1293, %v1641
        %v1706 = vsel %vm1578, %v1295, %v1642
        %v1707 = vsel %vm1579, %v1406, %v1643
        %v1708 = vsel %vm1580, %v1408, %v1644
        %v1709 = vsel %vm1581, %v1519, %v1645
        %v1710 = vsel %vm1582, %v1521, %v1646
        %v1711 = vsel %vm1583, %v1186, %v1647
        %v1712 = vsel %vm1584, %v1188, %v1648
        %v1713 = vsel %vm1585, %v1299, %v1649
        %v1714 = vsel %vm1586, %v1301, %v1650
        %v1715 = vsel %vm1587, %v1412, %v1651
        %v1716 = vsel %vm1588, %v1414, %v1652
        %v1717 = vsel %vm1589, %v1525, %v1653
        %v1718 = vsel %vm1590, %v1527, %v1654
        %v1719 = vsel %vm1591, %v1192, %v1655
        %v1720 = vsel %vm1592, %v1194, %v1656
        %v1721 = vsel %vm1593, %v1305, %v1657
        %v1722 = vsel %vm1594, %v1307, %v1658
        %v1723 = vsel %vm1595, %v1418, %v1659
        %v1724 = vsel %vm1596, %v1420, %v1660
        %v1725 = vsel %vm1597, %v1531, %v1661
        %v1726 = vsel %vm1598, %v1533, %v1662
        %v1727 = vld [vmem:[%s4] sm:$0xff]
        %v1728 = vld [vmem:[%s4 + $0x8] sm:$0xff]
        %v1729 = vld [vmem:[%s4 + $0x10] sm:$0xff]
        %v1730 = vld [vmem:[%s4 + $0x18] sm:$0xff]
        %v1731 = vld [vmem:[%s4 + $0x28] sm:$0xff]
        %v1732 = vld [vmem:[%s4 + $0x30] sm:$0xff]
        %v1733 = vld [vmem:[%s4 + $0x38] sm:$0xff]
        %v1734 = vld [vmem:[%s4 + $0x40] sm:$0xff]
        %v1735 = vld [vmem:[%s4 + $0x50] sm:$0xff]
        %v1736 = vld [vmem:[%s4 + $0x58] sm:$0xff]
        %v1737 = vld [vmem:[%s4 + $0x60] sm:$0xff]
        %v1738 = vld [vmem:[%s4 + $0x68] sm:$0xff]
        %v1739 = vld [vmem:[%s4 + $0x78] sm:$0xff]
        %v1740 = vld [vmem:[%s4 + $0x80] sm:$0xff]
        %v1741 = vld [vmem:[%s4 + $0x88] sm:$0xff]
        %v1742 = vld [vmem:[%s4 + $0x90] sm:$0xff]
        %v1743 = vld [vmem:[%s4 + $0xa0] sm:$0xff]
        %v1744 = vld [vmem:[%s4 + $0xa8] sm:$0xff]
        %v1745 = vld [vmem:[%s4 + $0xb0] sm:$0xff]
        %v1746 = vld [vmem:[%s4 + $0xb8] sm:$0xff]
        %v1747 = vld [vmem:[%s4 + $0xc8] sm:$0xff]
        %v1748 = vld [vmem:[%s4 + $0xd0] sm:$0xff]
        %v1749 = vld [vmem:[%s4 + $0xd8] sm:$0xff]
        %v1750 = vld [vmem:[%s4 + $0xe0] sm:$0xff]
        %v1751 = vld [vmem:[%s4 + $0xf0] sm:$0xff]
        %v1752 = vld [vmem:[%s4 + $0xf8] sm:$0xff]
        %v1753 = vld [vmem:[%s4 + $0x100] sm:$0xff]
        %v1754 = vld [vmem:[%s4 + $0x108] sm:$0xff]
        %v1755 = vld [vmem:[%s4 + $0x118] sm:$0xff]
        %v1756 = vld [vmem:[%s4 + $0x120] sm:$0xff]
        %v1757 = vld [vmem:[%s4 + $0x128] sm:$0xff]
        %v1758 = vld [vmem:[%s4 + $0x130] sm:$0xff]
        %v1759 = vld [vmem:[%s4 + $0x20] sm:$0xff]
        %v1760 = vld [vmem:[%s4 + $0x48] sm:$0xff]
        %v1761 = vld [vmem:[%s4 + $0x70] sm:$0xff]
        %v1762 = vld [vmem:[%s4 + $0x98] sm:$0xff]
        %v1763 = vld [vmem:[%s4 + $0xc0] sm:$0xff]
        %v1764 = vld [vmem:[%s4 + $0xe8] sm:$0xff]
        %v1765 = vld [vmem:[%s4 + $0x110] sm:$0xff]
        %v1766 = vld [vmem:[%s4 + $0x138] sm:$0xff]
        %1768 = vset.pattern.permute.xlu0 0
        %1769 = vperm.xlu0 %1768, %v1759
        %v1770 = vpop.permute.xlu0 %1769
        %1773 = vset.pattern.permute.xlu0 0
        %1774 = vperm.xlu0 %1773, %v1760
        %v1775 = vpop.permute.xlu0 %1774
        %1778 = vset.pattern.permute.xlu0 0
        %1779 = vperm.xlu0 %1778, %v1761
        %v1780 = vpop.permute.xlu0 %1779
        %1783 = vset.pattern.permute.xlu0 0
        %1784 = vperm.xlu0 %1783, %v1762
        %v1785 = vpop.permute.xlu0 %1784
        %1788 = vset.pattern.permute.xlu0 0
        %1789 = vperm.xlu0 %1788, %v1763
        %v1790 = vpop.permute.xlu0 %1789
        %1793 = vset.pattern.permute.xlu0 0
        %1794 = vperm.xlu0 %1793, %v1764
        %v1795 = vpop.permute.xlu0 %1794
        %1798 = vset.pattern.permute.xlu0 0
        %1799 = vperm.xlu0 %1798, %v1765
        %v1800 = vpop.permute.xlu0 %1799
        %1803 = vset.pattern.permute.xlu0 0
        %1804 = vperm.xlu0 %1803, %v1766
        %v1805 = vpop.permute.xlu0 %1804
        %1807 = vmatprep.subr.mxu0 0.0
        %1808 = vmatpush1.msra.mxu0 %v1663
        %1809 = vmatprep.subr.mxu0 0.0
        %1810 = vmatpush1.msra.mxu0 %v1671
        %1811 = vmatprep.subr.mxu0 0.0
        %1812 = vmatpush1.msra.mxu0 %v1679
        %1813 = vmatprep.subr.mxu0 0.0
        %1814 = vmatpush1.msra.mxu0 %v1687
        %1815 = vmatprep.subr.mxu0 0.0
        %1816 = vmatpush1.msra.mxu0 %v1695
        %1817 = vmatprep.subr.mxu0 0.0
        %1818 = vmatpush1.msra.mxu0 %v1703
        %1819 = vmatprep.subr.mxu0 0.0
        %1820 = vmatpush1.msra.mxu0 %v1711
        %1821 = vmatprep.subr.mxu0 0.0
        %1822 = vmatpush1.msra.mxu0 %v1719
        %1823 = vmatprep.subr.mxu0 0.0
        %1824 = vmatpush1.msra.mxu0 %v1664
        %1825 = vmatprep.subr.mxu0 0.0
        %1826 = vmatpush1.msra.mxu0 %v1672
        %1827 = vmatprep.subr.mxu0 0.0
        %1828 = vmatpush1.msra.mxu0 %v1680
        %1829 = vmatprep.subr.mxu0 0.0
        %1830 = vmatpush1.msra.mxu0 %v1688
        %1831 = vmatprep.subr.mxu0 0.0
        %1832 = vmatpush1.msra.mxu0 %v1696
        %1833 = vmatprep.subr.mxu0 0.0
        %1834 = vmatpush1.msra.mxu0 %v1704
        %1835 = vmatprep.subr.mxu0 0.0
        %1836 = vmatpush1.msra.mxu0 %v1712
        %1837 = vmatprep.subr.mxu0 0.0
        %1838 = vmatpush1.msra.mxu0 %v1720
        %1839 = vmatprep.subr.mxu0 0.0
        %1840 = vmatpush1.msra.mxu0 %v1665
        %1841 = vmatprep.subr.mxu0 0.0
        %1842 = vmatpush1.msra.mxu0 %v1673
        %1843 = vmatprep.subr.mxu0 0.0
        %1844 = vmatpush1.msra.mxu0 %v1681
        %1845 = vmatprep.subr.mxu0 0.0
        %1846 = vmatpush1.msra.mxu0 %v1689
        %1847 = vmatprep.subr.mxu0 0.0
        %1848 = vmatpush1.msra.mxu0 %v1697
        %1849 = vmatprep.subr.mxu0 0.0
        %1850 = vmatpush1.msra.mxu0 %v1705
        %1851 = vmatprep.subr.mxu0 0.0
        %1852 = vmatpush1.msra.mxu0 %v1713
        %1853 = vmatprep.subr.mxu0 0.0
        %1854 = vmatpush1.msra.mxu0 %v1721
        %1855 = vmatprep.subr.mxu0 0.0
        %1856 = vmatpush1.msra.mxu0 %v1666
        %1857 = vmatprep.subr.mxu0 0.0
        %1858 = vmatpush1.msra.mxu0 %v1674
        %1859 = vmatprep.subr.mxu0 0.0
        %1860 = vmatpush1.msra.mxu0 %v1682
        %1861 = vmatprep.subr.mxu0 0.0
        %1862 = vmatpush1.msra.mxu0 %v1690
        %1863 = vmatprep.subr.mxu0 0.0
        %1864 = vmatpush1.msra.mxu0 %v1698
        %1865 = vmatprep.subr.mxu0 0.0
        %1866 = vmatpush1.msra.mxu0 %v1706
        %1867 = vmatprep.subr.mxu0 0.0
        %1868 = vmatpush1.msra.mxu0 %v1714
        %1869 = vmatprep.subr.mxu0 0.0
        %1870 = vmatpush1.msra.mxu0 %v1722
        %1871 = vmatprep.mubr.f32.mxu0 %v1728
        %1872 = vmatmul.mubr.f32.gmra.mrb[0].mxu0 %v1727
        %v1873 = vpop.f32.mrb[0].mxu0
        %v1874 = vadd.f32 %v1770, %v1873
        %v1875 = vpop.f32.mrb[0].mxu0
        %1876 = vmatprep.mubr.f32.mxu0 %v1732
        %1877 = vmatmul.mubr.f32.gmra.mrb[0].mxu0 %v1731
        %v1878 = vpop.f32.mrb[0].mxu0
        %v1879 = vadd.f32 %v1775, %v1878
        %v1880 = vpop.f32.mrb[0].mxu0
        %1881 = vmatprep.mubr.f32.mxu0 %v1736
        %1882 = vmatmul.mubr.f32.gmra.mrb[0].mxu0 %v1735
        %v1883 = vpop.f32.mrb[0].mxu0
        %v1884 = vadd.f32 %v1780, %v1883
        %v1885 = vpop.f32.mrb[0].mxu0
        %1886 = vmatprep.mubr.f32.mxu0 %v1740
        %1887 = vmatmul.mubr.f32.gmra.mrb[0].mxu0 %v1739
        %v1888 = vpop.f32.mrb[0].mxu0
        %v1889 = vadd.f32 %v1785, %v1888
        %v1890 = vpop.f32.mrb[0].mxu0
        %1891 = vmatprep.mubr.f32.mxu0 %v1744
        %1892 = vmatmul.mubr.f32.gmra.mrb[0].mxu0 %v1743
        %v1893 = vpop.f32.mrb[0].mxu0
        %v1894 = vadd.f32 %v1790, %v1893
        %v1895 = vpop.f32.mrb[0].mxu0
        %1896 = vmatprep.mubr.f32.mxu0 %v1748
        %1897 = vmatmul.mubr.f32.gmra.mrb[0].mxu0 %v1747
        %v1898 = vpop.f32.mrb[0].mxu0
        %v1899 = vadd.f32 %v1795, %v1898
        %v1900 = vpop.f32.mrb[0].mxu0
        %1901 = vmatprep.mubr.f32.mxu0 %v1752
        %1902 = vmatmul.mubr.f32.gmra.mrb[0].mxu0 %v1751
        %v1903 = vpop.f32.mrb[0].mxu0
        %v1904 = vadd.f32 %v1800, %v1903
        %v1905 = vpop.f32.mrb[0].mxu0
        %1906 = vmatprep.mubr.f32.mxu0 %v1756
        %1907 = vmatmul.mubr.f32.gmra.mrb[0].mxu0 %v1755
        %v1908 = vpop.f32.mrb[0].mxu0
        %v1909 = vadd.f32 %v1805, %v1908
        %v1910 = vpop.f32.mrb[0].mxu0
        %1911 = vdwg.mxu0
        %1912 = vmatprep.subr.mxu0 0.0
        %1913 = vmatpush1.msra.mxu0 %v1667
        %1914 = vmatprep.subr.mxu0 0.0
        %1915 = vmatpush1.msra.mxu0 %v1675
        %1916 = vmatprep.subr.mxu0 0.0
        %1917 = vmatpush1.msra.mxu0 %v1683
        %1918 = vmatprep.subr.mxu0 0.0
        %1919 = vmatpush1.msra.mxu0 %v1691
        %1920 = vmatprep.subr.mxu0 0.0
        %1921 = vmatpush1.msra.mxu0 %v1699
        %1922 = vmatprep.subr.mxu0 0.0
        %1923 = vmatpush1.msra.mxu0 %v1707
        %1924 = vmatprep.subr.mxu0 0.0
        %1925 = vmatpush1.msra.mxu0 %v1715
        %1926 = vmatprep.subr.mxu0 0.0
        %1927 = vmatpush1.msra.mxu0 %v1723
        %1928 = vmatprep.subr.mxu0 0.0
        %1929 = vmatpush1.msra.mxu0 %v1668
        %1930 = vmatprep.subr.mxu0 0.0
        %1931 = vmatpush1.msra.mxu0 %v1676
        %1932 = vmatprep.subr.mxu0 0.0
        %1933 = vmatpush1.msra.mxu0 %v1684
        %1934 = vmatprep.subr.mxu0 0.0
        %1935 = vmatpush1.msra.mxu0 %v1692
        %1936 = vmatprep.subr.mxu0 0.0
        %1937 = vmatpush1.msra.mxu0 %v1700
        %1938 = vmatprep.subr.mxu0 0.0
        %1939 = vmatpush1.msra.mxu0 %v1708
        %1940 = vmatprep.subr.mxu0 0.0
        %1941 = vmatpush1.msra.mxu0 %v1716
        %1942 = vmatprep.subr.mxu0 0.0
        %1943 = vmatpush1.msra.mxu0 %v1724
        %1944 = vmatprep.subr.mxu0 0.0
        %1945 = vmatpush1.msra.mxu0 %v1669
        %1946 = vmatprep.subr.mxu0 0.0
        %1947 = vmatpush1.msra.mxu0 %v1677
        %1948 = vmatprep.subr.mxu0 0.0
        %1949 = vmatpush1.msra.mxu0 %v1685
        %1950 = vmatprep.subr.mxu0 0.0
        %1951 = vmatpush1.msra.mxu0 %v1693
        %1952 = vmatprep.subr.mxu0 0.0
        %1953 = vmatpush1.msra.mxu0 %v1701
        %1954 = vmatprep.subr.mxu0 0.0
        %1955 = vmatpush1.msra.mxu0 %v1709
        %1956 = vmatprep.subr.mxu0 0.0
        %1957 = vmatpush1.msra.mxu0 %v1717
        %1958 = vmatprep.subr.mxu0 0.0
        %1959 = vmatpush1.msra.mxu0 %v1725
        %1960 = vmatprep.subr.mxu0 0.0
        %1961 = vmatpush1.msra.mxu0 %v1670
        %1962 = vmatprep.subr.mxu0 0.0
        %1963 = vmatpush1.msra.mxu0 %v1678
        %1964 = vmatprep.subr.mxu0 0.0
        %1965 = vmatpush1.msra.mxu0 %v1686
        %1966 = vmatprep.subr.mxu0 0.0
        %1967 = vmatpush1.msra.mxu0 %v1694
        %1968 = vmatprep.subr.mxu0 0.0
        %1969 = vmatpush1.msra.mxu0 %v1702
        %1970 = vmatprep.subr.mxu0 0.0
        %1971 = vmatpush1.msra.mxu0 %v1710
        %1972 = vmatprep.subr.mxu0 0.0
        %1973 = vmatpush1.msra.mxu0 %v1718
        %1974 = vmatprep.subr.mxu0 0.0
        %1975 = vmatpush1.msra.mxu0 %v1726
        %1976 = vmatprep.mubr.f32.mxu0 %v1730
        %1977 = vmatmul.mubr.f32.gmra.mrb[0].mxu0 %v1729
        %v1978 = vpop.f32.mrb[0].mxu0
        %v1979 = vadd.f32 %v1874, %v1978
        %v1980 = vpop.f32.mrb[0].mxu0
        %1981 = vmatprep.mubr.f32.mxu0 %v1734
        %1982 = vmatmul.mubr.f32.gmra.mrb[0].mxu0 %v1733
        %v1983 = vpop.f32.mrb[0].mxu0
        %v1984 = vadd.f32 %v1879, %v1983
        %v1985 = vpop.f32.mrb[0].mxu0
        %1986 = vmatprep.mubr.f32.mxu0 %v1738
        %1987 = vmatmul.mubr.f32.gmra.mrb[0].mxu0 %v1737
        %v1988 = vpop.f32.mrb[0].mxu0
        %v1989 = vadd.f32 %v1884, %v1988
        %v1990 = vpop.f32.mrb[0].mxu0
        %1991 = vmatprep.mubr.f32.mxu0 %v1742
        %1992 = vmatmul.mubr.f32.gmra.mrb[0].mxu0 %v1741
        %v1993 = vpop.f32.mrb[0].mxu0
        %v1994 = vadd.f32 %v1889, %v1993
        %v1995 = vpop.f32.mrb[0].mxu0
        %1996 = vmatprep.mubr.f32.mxu0 %v1746
        %1997 = vmatmul.mubr.f32.gmra.mrb[0].mxu0 %v1745
        %v1998 = vpop.f32.mrb[0].mxu0
        %v1999 = vadd.f32 %v1894, %v1998
        %v2000 = vpop.f32.mrb[0].mxu0
        %2001 = vmatprep.mubr.f32.mxu0 %v1750
        %2002 = vmatmul.mubr.f32.gmra.mrb[0].mxu0 %v1749
        %v2003 = vpop.f32.mrb[0].mxu0
        %v2004 = vadd.f32 %v1899, %v2003
        %v2005 = vpop.f32.mrb[0].mxu0
        %2006 = vmatprep.mubr.f32.mxu0 %v1754
        %2007 = vmatmul.mubr.f32.gmra.mrb[0].mxu0 %v1753
        %v2008 = vpop.f32.mrb[0].mxu0
        %v2009 = vadd.f32 %v1904, %v2008
        %v2010 = vpop.f32.mrb[0].mxu0
        %2011 = vmatprep.mubr.f32.mxu0 %v1758
        %2012 = vmatmul.mubr.f32.gmra.mrb[0].mxu0 %v1757
        %v2013 = vpop.f32.mrb[0].mxu0
        %v2014 = vadd.f32 %v1909, %v2013
        %v2015 = vpop.f32.mrb[0].mxu0
        %2016 = vdwg.mxu0
        %v2017 = vmul.f32 %v1979, 0.5
        %v2018 = vmul.f32 %v1984, 0.5
        %v2019 = vmul.f32 %v1989, 0.5
        %v2020 = vmul.f32 %v1994, 0.5
        %v2021 = vmul.f32 %v1999, 0.5
        %v2022 = vmul.f32 %v2004, 0.5
        %v2023 = vmul.f32 %v2009, 0.5
        %v2024 = vmul.f32 %v2014, 0.5
        %v2025 = vtanh.pop %v2017
        %v2026 = vtanh.pop %v2018
        %v2027 = vtanh.pop %v2019
        %v2028 = vtanh.pop %v2020
        %v2029 = vtanh.pop %v2021
        %v2030 = vtanh.pop %v2022
        %v2031 = vtanh.pop %v2023
        %v2032 = vtanh.pop %v2024
        %v2033 = vadd.f32 %v2025, 1.0
        %v2034 = vadd.f32 %v2026, 1.0
        %v2035 = vadd.f32 %v2027, 1.0
        %v2036 = vadd.f32 %v2028, 1.0
        %v2037 = vadd.f32 %v2029, 1.0
        %v2038 = vadd.f32 %v2030, 1.0
        %v2039 = vadd.f32 %v2031, 1.0
        %v2040 = vadd.f32 %v2032, 1.0
        %v2041 = vmul.f32 %v2033, 0.5
        %v2042 = vmul.f32 %v2034, 0.5
        %v2043 = vmul.f32 %v2035, 0.5
        %v2044 = vmul.f32 %v2036, 0.5
        %v2045 = vmul.f32 %v2037, 0.5
        %v2046 = vmul.f32 %v2038, 0.5
        %v2047 = vmul.f32 %v2039, 0.5
        %v2048 = vmul.f32 %v2040, 0.5
        %v2049 = vmul.f32 %v1979, %v2041
        %v2050 = vmul.f32 %v1984, %v2042
        %v2051 = vmul.f32 %v1989, %v2043
        %v2052 = vmul.f32 %v1994, %v2044
        %v2053 = vmul.f32 %v1999, %v2045
        %v2054 = vmul.f32 %v2004, %v2046
        %v2055 = vmul.f32 %v2009, %v2047
        %v2056 = vmul.f32 %v2014, %v2048
        %v2057 = vld [vmem:[%s5] sm:$0xff]
        %v2058 = vld [vmem:[%s5 + $0x8] sm:$0xff]
        %v2059 = vld [vmem:[%s5 + $0x10] sm:$0xff]
        %v2060 = vld [vmem:[%s5 + $0x18] sm:$0xff]
        %2062 = vset.pattern.permute.xlu0 64
        %2063 = vperm.xlu0 %2062, %v2057
        %v2064 = vpop.permute.xlu0 %2063
        %2067 = vset.pattern.permute.xlu0 64
        %2068 = vperm.xlu0 %2067, %v2058
        %v2069 = vpop.permute.xlu0 %2068
        %2072 = vset.pattern.permute.xlu0 64
        %2073 = vperm.xlu0 %2072, %v2059
        %v2074 = vpop.permute.xlu0 %2073
        %2077 = vset.pattern.permute.xlu0 64
        %2078 = vperm.xlu0 %2077, %v2060
        %v2079 = vpop.permute.xlu0 %2078
        %vm2081 = vcmask 523264
        %v2082 = vsel %vm2081, %v2057, 0
        %v2084 = vsel %vm2081, %v2058, 0
        %v2086 = vsel %vm2081, %v2059, 0
        %v2088 = vsel %vm2081, %v2060, 0
        %2090 = vmatprep.subr.mxu0 0.0
        %2091 = vmatpush1.msra.mxu0 %v2049
        %2092 = vmatprep.subr.mxu0 0.0
        %2093 = vmatpush1.msra.mxu0 %v2050
        %2094 = vmatprep.subr.mxu0 0.0
        %2095 = vmatpush1.msra.mxu0 %v2051
        %2096 = vmatprep.subr.mxu0 0.0
        %2097 = vmatpush1.msra.mxu0 %v2052
        %2098 = vmatprep.subr.mxu0 0.0
        %2099 = vmatpush1.msra.mxu0 %v2053
        %2100 = vmatprep.subr.mxu0 0.0
        %2101 = vmatpush1.msra.mxu0 %v2054
        %2102 = vmatprep.subr.mxu0 0.0
        %2103 = vmatpush1.msra.mxu0 %v2055
        %2104 = vmatprep.subr.mxu0 0.0
        %2105 = vmatpush1.msra.mxu0 %v2056
        %2106 = vmatprep.subr.mxu0 0.0
        %2107 = vmatpush1.msra.mxu0 0.0
        %2108 = vmatprep.subr.mxu0 0.0
        %2109 = vmatpush1.msra.mxu0 0.0
        %2110 = vmatprep.subr.mxu0 0.0
        %2111 = vmatpush1.msra.mxu0 0.0
        %2112 = vmatprep.subr.mxu0 0.0
        %2113 = vmatpush1.msra.mxu0 0.0
        %2114 = vmatprep.subr.mxu0 0.0
        %2115 = vmatpush1.msra.mxu0 0.0
        %2116 = vmatprep.subr.mxu0 0.0
        %2117 = vmatpush1.msra.mxu0 0.0
        %2118 = vmatprep.subr.mxu0 0.0
        %2119 = vmatpush1.msra.mxu0 0.0
        %2120 = vmatprep.subr.mxu0 0.0
        %2121 = vmatpush1.msra.mxu0 0.0
        %2122 = vmatprep.subr.mxu0 0.0
        %2123 = vmatpush1.msra.mxu0 0.0
        %2124 = vmatprep.subr.mxu0 0.0
        %2125 = vmatpush1.msra.mxu0 0.0
        %2126 = vmatprep.subr.mxu0 0.0
        %2127 = vmatpush1.msra.mxu0 0.0
        %2128 = vmatprep.subr.mxu0 0.0
        %2129 = vmatpush1.msra.mxu0 0.0
        %2130 = vmatprep.subr.mxu0 0.0
        %2131 = vmatpush1.msra.mxu0 0.0
        %2132 = vmatprep.subr.mxu0 0.0
        %2133 = vmatpush1.msra.mxu0 0.0
        %2134 = vmatprep.subr.mxu0 0.0
        %2135 = vmatpush1.msra.mxu0 0.0
        %2136 = vmatprep.subr.mxu0 0.0
        %2137 = vmatpush1.msra.mxu0 0.0
        %2138 = vmatprep.subr.mxu0 0.0
        %2139 = vmatpush1.msra.mxu0 0.0
        %2140 = vmatprep.subr.mxu0 0.0
        %2141 = vmatpush1.msra.mxu0 0.0
        %2142 = vmatprep.subr.mxu0 0.0
        %2143 = vmatpush1.msra.mxu0 0.0
        %2144 = vmatprep.subr.mxu0 0.0
        %2145 = vmatpush1.msra.mxu0 0.0
        %2146 = vmatprep.subr.mxu0 0.0
        %2147 = vmatpush1.msra.mxu0 0.0
        %2148 = vmatprep.subr.mxu0 0.0
        %2149 = vmatpush1.msra.mxu0 0.0
        %2150 = vmatprep.subr.mxu0 0.0
        %2151 = vmatpush1.msra.mxu0 0.0
        %2152 = vmatprep.subr.mxu0 0.0
        %2153 = vmatpush1.msra.mxu0 0.0
        %2154 = vmatprep.mubr.f32.mxu0 0.0
        %2155 = vmatmul.mubr.f32.gmra.mrb[0].mxu0 %v2082
        %v2156 = vpop.f32.mrb[0].mxu0
        %v2157 = vadd.f32 %v2064, %v2156
        %v2158 = vpop.f32.mrb[0].mxu0
        %2159 = vmatprep.mubr.f32.mxu0 0.0
        %2160 = vmatmul.mubr.f32.gmra.mrb[0].mxu0 %v2084
        %v2161 = vpop.f32.mrb[0].mxu0
        %v2162 = vadd.f32 %v2069, %v2161
        %v2163 = vpop.f32.mrb[0].mxu0
        %2164 = vmatprep.mubr.f32.mxu0 0.0
        %2165 = vmatmul.mubr.f32.gmra.mrb[0].mxu0 %v2086
        %v2166 = vpop.f32.mrb[0].mxu0
        %v2167 = vadd.f32 %v2074, %v2166
        %v2168 = vpop.f32.mrb[0].mxu0
        %2169 = vmatprep.mubr.f32.mxu0 0.0
        %2170 = vmatmul.mubr.f32.gmra.mrb[0].mxu0 %v2088
        %v2171 = vpop.f32.mrb[0].mxu0
        %v2172 = vadd.f32 %v2079, %v2171
        %v2173 = vpop.f32.mrb[0].mxu0
        %2174 = vdwg.mxu0
        %v2175 = vmul.f32 %v2157, 0.5
        %v2176 = vmul.f32 %v2162, 0.5
        %v2177 = vmul.f32 %v2167, 0.5
        %v2178 = vmul.f32 %v2172, 0.5
        %v2179 = vtanh.pop %v2175
        %v2180 = vtanh.pop %v2176
        %v2181 = vtanh.pop %v2177
        %v2182 = vtanh.pop %v2178
        %v2183 = vadd.f32 %v2179, 1.0
        %v2184 = vadd.f32 %v2180, 1.0
        %v2185 = vadd.f32 %v2181, 1.0
        %v2186 = vadd.f32 %v2182, 1.0
        %v2187 = vmul.f32 %v2183, 0.5
        %v2188 = vmul.f32 %v2184, 0.5
        %v2189 = vmul.f32 %v2185, 0.5
        %v2190 = vmul.f32 %v2186, 0.5
        %v2191 = vmul.f32 %v2157, %v2187
        %v2192 = vmul.f32 %v2162, %v2188
        %v2193 = vmul.f32 %v2167, %v2189
        %v2194 = vmul.f32 %v2172, %v2190
        %v2195 = vld [vmem:[%s6] sm:$0x7]
        %2197 = vset.pattern.permute.xlu0 32
        %2198 = vperm.xlu0 %2197, %v2195
        %v2199 = vpop.permute.xlu0 %2198
        %vm2201 = vcmask 261120
        %v2202 = vsel %vm2201, %v2195, 0
        %2204 = vmatprep.subr.mxu0 0.0
        %2205 = vmatpush1.msra.mxu0 %v2191
        %2206 = vmatprep.subr.mxu0 0.0
        %2207 = vmatpush1.msra.mxu0 %v2192
        %2208 = vmatprep.subr.mxu0 0.0
        %2209 = vmatpush1.msra.mxu0 %v2193
        %2210 = vmatprep.subr.mxu0 0.0
        %2211 = vmatpush1.msra.mxu0 %v2194
        %2212 = vmatprep.subr.mxu0 0.0
        %2213 = vmatpush1.msra.mxu0 0.0
        %2214 = vmatprep.subr.mxu0 0.0
        %2215 = vmatpush1.msra.mxu0 0.0
        %2216 = vmatprep.subr.mxu0 0.0
        %2217 = vmatpush1.msra.mxu0 0.0
        %2218 = vmatprep.subr.mxu0 0.0
        %2219 = vmatpush1.msra.mxu0 0.0
        %2220 = vmatprep.subr.mxu0 0.0
        %2221 = vmatpush1.msra.mxu0 0.0
        %2222 = vmatprep.subr.mxu0 0.0
        %2223 = vmatpush1.msra.mxu0 0.0
        %2224 = vmatprep.subr.mxu0 0.0
        %2225 = vmatpush1.msra.mxu0 0.0
        %2226 = vmatprep.subr.mxu0 0.0
        %2227 = vmatpush1.msra.mxu0 0.0
        %2228 = vmatprep.subr.mxu0 0.0
        %2229 = vmatpush1.msra.mxu0 0.0
        %2230 = vmatprep.subr.mxu0 0.0
        %2231 = vmatpush1.msra.mxu0 0.0
        %2232 = vmatprep.subr.mxu0 0.0
        %2233 = vmatpush1.msra.mxu0 0.0
        %2234 = vmatprep.subr.mxu0 0.0
        %2235 = vmatpush1.msra.mxu0 0.0
        %2236 = vmatprep.subr.mxu0 0.0
        %2237 = vmatpush1.msra.mxu0 0.0
        %2238 = vmatprep.subr.mxu0 0.0
        %2239 = vmatpush1.msra.mxu0 0.0
        %2240 = vmatprep.subr.mxu0 0.0
        %2241 = vmatpush1.msra.mxu0 0.0
        %2242 = vmatprep.subr.mxu0 0.0
        %2243 = vmatpush1.msra.mxu0 0.0
        %2244 = vmatprep.subr.mxu0 0.0
        %2245 = vmatpush1.msra.mxu0 0.0
        %2246 = vmatprep.subr.mxu0 0.0
        %2247 = vmatpush1.msra.mxu0 0.0
        %2248 = vmatprep.subr.mxu0 0.0
        %2249 = vmatpush1.msra.mxu0 0.0
        %2250 = vmatprep.subr.mxu0 0.0
        %2251 = vmatpush1.msra.mxu0 0.0
        %2252 = vmatprep.subr.mxu0 0.0
        %2253 = vmatpush1.msra.mxu0 0.0
        %2254 = vmatprep.subr.mxu0 0.0
        %2255 = vmatpush1.msra.mxu0 0.0
        %2256 = vmatprep.subr.mxu0 0.0
        %2257 = vmatpush1.msra.mxu0 0.0
        %2258 = vmatprep.subr.mxu0 0.0
        %2259 = vmatpush1.msra.mxu0 0.0
        %2260 = vmatprep.subr.mxu0 0.0
        %2261 = vmatpush1.msra.mxu0 0.0
        %2262 = vmatprep.subr.mxu0 0.0
        %2263 = vmatpush1.msra.mxu0 0.0
        %2264 = vmatprep.subr.mxu0 0.0
        %2265 = vmatpush1.msra.mxu0 0.0
        %2266 = vmatprep.subr.mxu0 0.0
        %2267 = vmatpush1.msra.mxu0 0.0
        %2268 = vmatprep.mubr.f32.mxu0 0.0
        %2269 = vmatmul.mubr.f32.gmra.mrb[0].mxu0 %v2202
        %v2270 = vpop.f32.mrb[0].mxu0
        %v2271 = vadd.f32 %v2199, %v2270
        %v2272 = vpop.f32.mrb[0].mxu0
        %2273 = vdwg.mxu0
        %2274 = vst [vmem:[%s270] sm:$0x7] %v2271
        %s2275 = sand.u32 %s181, 1
        %s2276 = scalar_lea.sflag [#allocation3], %s2275
        %s2277 = sand.u32 %s181, 1
        %s2278 = smul.addr %s2277, 4
        %s2279 = scalar_lea.vmem [#allocation2], %s2278
        // Predicated region
        $region49: #{cnn_diffusion_forward.1} parent=47 // pred_check
          %p2280 = pneg %p191
        $region50: #{cnn_diffusion_forward.1} parent=47 // pred_check_branch
          %2282 = sbr.rel (%p2280) target = $region52
        $region51: #{cnn_diffusion_forward.1} parent=47 // pred_region
          %s2284 = ssub.s32 64, 64
          %2285 = vsyncadd %s2276, %s2284
          %s2286 = smul.addr %s21, 64
          %s2287 = scalar_lea.hbm %s7, %s2286
          %s2289 = sshll.u32 %s2279, 4
          %s2290 = int_to_ptr.vmem [resolvable:$true] %s2289
          %2292 = dma.vmem_to_hbm [thread:$0]  %s2290, 64, %s2287, %s2276
        $region52: #{cnn_diffusion_forward.1} parent=47 // pred_fallthru
          _
      $region48: #{cnn_diffusion_forward.1} parent=5 // pred_fallthru
        _
      %p2293 = scmp.le.s32.totalorder 2, %s16
      // Predicated region
      $region53: #{cnn_diffusion_forward.1} parent=5 // pred_check
        %p2294 = pneg %p2293
      $region54: #{cnn_diffusion_forward.1} parent=5 // pred_check_branch
        %2296 = sbr.rel (%p2294) target = $region56
      $region55: #{cnn_diffusion_forward.1} parent=5 // pred_region
        %s2297 = ssub.s32 %s16, 2
        // Predicated region
        $region57: #{cnn_diffusion_forward.1} parent=55 // pred_check
          %p2298 = pneg %p197
        $region58: #{cnn_diffusion_forward.1} parent=55 // pred_check_branch
          %2300 = sbr.rel (%p2298) target = $region60
        $region59: #{cnn_diffusion_forward.1} parent=55 // pred_region
          %s2301 = sand.u32 %s182, 1
          %s2302 = scalar_lea.sflag [#allocation3], %s2301
          %s2303 = sand.u32 %s182, 1
          %s2304 = smul.addr %s2303, 4
          %s2305 = scalar_lea.vmem [#allocation2], %s2304
          %2306 = dma.done %s2302, 64
        $region60: #{cnn_diffusion_forward.1} parent=55 // pred_fallthru
          _
      $region56: #{cnn_diffusion_forward.1} parent=5 // pred_fallthru
        _
    $region6: #{cnn_diffusion_forward.1} parent=1 // loop_footer
      %s20 = sadd.s32 1, %s16
    $region7: #{cnn_diffusion_forward.1} parent=1 // loop_footer_branch
      %15 = sbr.rel target = $region3
    $region8: #{cnn_diffusion_forward.1} parent=1 // loop_exit
      _
    %2307 = vsyncpa [#allocation3], 1
    %s2308 = scalar_lea.sflag [#allocation3], 1
    %2309 = vsyncpa %s2308, 1

</llo_original>
